<compile_context>
chip_gen: v5e
topology: v5e:2x2
jax: 0.10.0
libtpu: 0.0.40
codegen_flags: <defaults>
</compile_context>

<pallas_src>
import functools

import numpy as np
import jax
import jax.numpy as jnp
from jax.experimental import pallas as pl
from jax.experimental.pallas import tpu as pltpu

# ----------------------------- static config ------------------------------
H = 16
W = 16
HW = H * W
POOL = 2                      # down_scale_factor
Ho, Wo = H // POOL, W // POOL
HoWo = Ho * Wo
C_IN = 4                      # in_channels
C_OUT = 8                     # out_channels
NUM_CONV = 2                  # num_conv
EPS = 1e-5                    # InstanceNorm2d default eps
NEG_SLOPE = 0.01              # LeakyReLU default negative_slope
SUBLANE = 8


def _round_up(v, m):
    return (v + m - 1) // m * m


# --------------------- lazy pltpu.roll direction probe ----------------------
@functools.lru_cache(maxsize=None)
def _get_roll_mode():
    """Tiny one-time probe (lazy: first forward call) that confirms pltpu.roll lowers
    and determines its rotation direction; falls back to jnp.roll otherwise."""
    def probe(x_ref, o_ref):
        o_ref[...] = pltpu.roll(x_ref[...], 1, axis=1)

    try:
        x = jnp.broadcast_to(jnp.arange(128, dtype=jnp.float32), (8, 128))
        out = pl.pallas_call(
            probe, out_shape=jax.ShapeDtypeStruct((8, 128), jnp.float32))(x)
        first = int(jax.block_until_ready(out)[0, 0])
        # np.roll convention -> out[0,0] == 127 ; reversed convention -> == 1
        return "roll_rev" if first == 1 else "roll_np"
    except Exception:  # pragma: no cover
        return "jnp"


# ------------------------------- fused kernel ------------------------------
def _down_block_kernel(x_ref, mask_ref, seg_ref, segT_ref, sel_ref, *refs,
                       num_conv, roll_mode, batch):
    """Fused ConvBlock (num_conv x [Conv3x3 + InstanceNorm + LeakyReLU]) + MaxPool2d(2).

    x_ref   : (1, Cpad, L)  with L = batch*HW, channels on sublanes, samples stacked on lanes
    mask_ref: (9, L)        0/1 zero-padding masks, one row per 3x3 tap
    seg_ref : (L, batch)    block-diagonal per-sample ones (reduce over each 256-lane segment)
    segT_ref: (batch, L)    its transpose (broadcast per-sample scalars back to lanes)
    sel_ref : (L, batch*HoWo) block-diagonal one-hot stride-2 lane selector for the pool
    per layer l: w (Cout_pad, 9*Cin_pad), gamma/beta (Cout_pad, 1)     [no conv bias: cancels in IN]
    outputs : skip (1, Cout_pad, L), pooled (1, Cout_pad, batch*HoWo)
    """
    param_refs = refs[:3 * num_conv]
    skip_ref, pool_ref = refs[3 * num_conv:]
    L = batch * HW
    inv_hw = 1.0 / HW

    def shift(a, d):
        # y[:, r] = a[:, (r + d) % L]; cross-sample / wrap lanes are masked by callers.
        if d == 0:
            return a
        if roll_mode == "roll_np":
            return pltpu.roll(a, (-d) % L, axis=1)      # XLU lane rotation
        if roll_mode == "roll_rev":
            return pltpu.roll(a, d % L, axis=1)
        return jnp.roll(a, -d, axis=1)                   # fallback

    tap_offsets = [dh * W + dw for dh in (-1, 0, 1) for dw in (-1, 0, 1)]

    feat = x_ref[0]                                      # (Cin_pad, L)
    for l in range(num_conv):
        w_ref, g_ref, be_ref = param_refs[3 * l: 3 * l + 3]

        # im2col: 9 shifted + zero-padded taps -> single wide MXU matmul.
        pieces = []
        for t, d in enumerate(tap_offsets):
            if d == 0:
                pieces.append(feat)
            else:
                pieces.append(shift(feat, d) * mask_ref[t:t + 1, :])
        patch = jnp.concatenate(pieces, axis=0)          # (9*Cin_pad, L)
        acc = jnp.dot(w_ref[...], patch,
                      preferred_element_type=jnp.float32)  # (Cout_pad, L)

        # InstanceNorm2d (per-sample, per-channel, biased variance), gamma folded in.
        if batch == 1:
            sums = jnp.sum(acc, axis=1, keepdims=True)               # (Cout, 1)
            sqs = jnp.sum(acc * acc, axis=1, keepdims=True)
            mean = sums * inv_hw
            var = sqs * inv_hw - mean * mean
            scale = jax.lax.rsqrt(var + EPS) * g_ref[...]            # (Cout, 1)
            offset = be_ref[...] - mean * scale
            y = acc * scale + offset
        else:
            sums = jnp.dot(acc, seg_ref[...],
                           preferred_element_type=jnp.float32)       # (Cout, B)
            sqs = jnp.dot(acc * acc, seg_ref[...],
                          preferred_element_type=jnp.float32)        # (Cout, B)
            mean = sums * inv_hw
            var = sqs * inv_hw - mean * mean
            scale = jax.lax.rsqrt(var + EPS) * g_ref[...]            # (Cout, B)
            offset = be_ref[...] - mean * scale                      # (Cout, B)
            scale_full = jnp.dot(scale, segT_ref[...],
                                 preferred_element_type=jnp.float32)  # (Cout, L)
            offset_full = jnp.dot(offset, segT_ref[...],
                                  preferred_element_type=jnp.float32)
            y = acc * scale_full + offset_full

        # LeakyReLU (Dropout(p=0) == identity).
        feat = jnp.maximum(y, NEG_SLOPE * y)

    skip_ref[0] = feat                                   # lane-dense (Cout_pad, L) store

    # MaxPool2d(2): 2x2 window max via lane rolls, then stride-2 down-selection matmul.
    hmax = jnp.maximum(feat, shift(feat, 1))             # max over (w, w+1)
    vmax = jnp.maximum(hmax, shift(hmax, W))             # max over (h, h+1)
    pool_ref[0] = jnp.dot(vmax, sel_ref[...], preferred_element_type=jnp.float32)


# ----------------------------- wrapper helpers -------------------------------
def _make_constants(batch):
    """Resident constants: padding masks, per-sample segment ones, pool selector."""
    r = np.arange(HW)
    hh, ww = r // W, r % W
    rows = []
    for dh in (-1, 0, 1):
        for dw in (-1, 0, 1):
            valid = ((hh + dh >= 0) & (hh + dh < H) &
                     (ww + dw >= 0) & (ww + dw < W))
            rows.append(valid.astype(np.float32))
    mask = np.tile(np.stack(rows, 0), (1, batch))                       # (9, B*HW)

    j = np.arange(HoWo)
    keep = (POOL * (j // Wo)) * W + POOL * (j % Wo)
    sel1 = (r[:, None] == keep[None, :]).astype(np.float32)             # (HW, HoWo)
    eye = np.eye(batch, dtype=np.float32)
    sel = np.kron(eye, sel1)                                            # (B*HW, B*HoWo)
    seg = np.kron(eye, np.ones((HW, 1), np.float32))                    # (B*HW, B)
    return (jnp.asarray(mask), jnp.asarray(seg),
            jnp.asarray(seg.T), jnp.asarray(sel))


def _prep_layer(wt, g, be):
    """(Cout, Cin, 3, 3) OIHW -> (Cout_pad, 9*Cin_pad) im2col weight + (Cout_pad, 1) affine.
    Conv bias is intentionally dropped: InstanceNorm's mean subtraction cancels it exactly."""
    co, ci = wt.shape[0], wt.shape[1]
    ci_pad = _round_up(ci, SUBLANE)
    co_pad = _round_up(co, SUBLANE)
    wt = jnp.pad(wt, ((0, co_pad - co), (0, ci_pad - ci), (0, 0), (0, 0)))
    w2 = jnp.transpose(wt, (0, 2, 3, 1)).reshape(co_pad, 9 * ci_pad)    # (kh, kw, ci) order
    g2 = jnp.pad(g, (0, co_pad - co)).reshape(co_pad, 1)                # padded gamma = 0
    be2 = jnp.pad(be, (0, co_pad - co)).reshape(co_pad, 1)              # padded beta  = 0
    return w2, g2, be2


@functools.partial(jax.jit, static_argnames=("samples_per_step", "roll_mode"))
def _forward_impl(x_nchw, layer_params, *, samples_per_step, roll_mode):
    n, cin, h, w = x_nchw.shape
    assert (h, w) == (H, W)
    B = samples_per_step
    G = -(-n // B)
    n_pad = G * B
    cin_pad = _round_up(cin, SUBLANE)
    L = B * HW

    # NCHW -> (G, Cpad, B*HW): B samples stacked along the lane axis of each block.
    x_flat = x_nchw.reshape(n, cin, HW)
    x_flat = jnp.pad(x_flat, ((0, n_pad - n), (0, cin_pad - cin), (0, 0)))
    x_packed = (x_flat.reshape(G, B, cin_pad, HW)
                .transpose(0, 2, 1, 3).reshape(G, cin_pad, L))

    mask, seg, segT, sel = _make_constants(B)

    args = [x_packed, mask, seg, segT, sel]
    in_specs = [
        pl.BlockSpec((1, cin_pad, L), lambda i: (i, 0, 0)),
        pl.BlockSpec((9, L), lambda i: (0, 0)),
        pl.BlockSpec((L, B), lambda i: (0, 0)),
        pl.BlockSpec((B, L), lambda i: (0, 0)),
        pl.BlockSpec((L, B * HoWo), lambda i: (0, 0)),
    ]
    cout_pad = None
    for (wt, _b, g, be) in layer_params:       # conv bias ignored (cancelled by IN)
        w2, g2, be2 = _prep_layer(wt, g, be)
        cout_pad = w2.shape[0]
        args += [w2, g2, be2]
        in_specs += [
            pl.BlockSpec(w2.shape, lambda i: (0, 0)),
            pl.BlockSpec((cout_pad, 1), lambda i: (0, 0)),
            pl.BlockSpec((cout_pad, 1), lambda i: (0, 0)),
        ]
    cout = layer_params[-1][0].shape[0]

    skip_p, pool_p = pl.pallas_call(
        functools.partial(_down_block_kernel, num_conv=len(layer_params),
                          roll_mode=roll_mode, batch=B),
        out_shape=(jax.ShapeDtypeStruct((G, cout_pad, L), jnp.float32),
                   jax.ShapeDtypeStruct((G, cout_pad, B * HoWo), jnp.float32)),
        grid=(G,),
        in_specs=in_specs,
        out_specs=(pl.BlockSpec((1, cout_pad, L), lambda i: (i, 0, 0)),
                   pl.BlockSpec((1, cout_pad, B * HoWo), lambda i: (i, 0, 0))),
        compiler_params=pltpu.CompilerParams(dimension_semantics=("parallel",)),
    )(*args)

    skip = (skip_p.reshape(G, cout_pad, B, HW).transpose(0, 2, 1, 3)
            .reshape(n_pad, cout_pad, HW)[:n, :cout].reshape(n, cout, H, W))
    out = (pool_p.reshape(G, cout_pad, B, HoWo).transpose(0, 2, 1, 3)
           .reshape(n_pad, cout_pad, HoWo)[:n, :cout].reshape(n, cout, Ho, Wo))
    return skip, out


def down_block_forward(x_nchw, layer_params, samples_per_step=None):
    """Pallas DownBlock forward.  x_nchw: (N, Cin, H, W).  Returns (skip, pooled), NCHW.

    samples_per_step: samples packed into one grid step (lane-stacked).  Default
    ceil(N/2) keeps >= 2 grid steps for v7x's two TensorCores; pass N on 1-TC
    v5e/v6e for maximum per-step-overhead amortization.
    """
    n = x_nchw.shape[0]
    if samples_per_step is None:
        samples_per_step = max(1, (n + 1) // 2)
    roll_mode = _get_roll_mode()
    return _forward_impl(x_nchw, layer_params,
                         samples_per_step=int(samples_per_step), roll_mode=roll_mode)


# ------------------------- pure-JAX reference ------------------------------
def down_block_reference(x_nchw, layer_params):
    y = x_nchw
    for (wt, b, g, be) in layer_params:
        y = jax.lax.conv_general_dilated(
            y, wt, (1, 1), "SAME",
            dimension_numbers=("NCHW", "OIHW", "NCHW"))
        y = y + b[None, :, None, None]
        mean = jnp.mean(y, axis=(2, 3), keepdims=True)
        var = jnp.mean((y - mean) ** 2, axis=(2, 3), keepdims=True)
        y = (y - mean) * jax.lax.rsqrt(var + EPS)
        y = y * g[None, :, None, None] + be[None, :, None, None]
        y = jnp.where(y > 0, y, NEG_SLOPE * y)
    skip = y
    pooled = jax.lax.reduce_window(y, -jnp.inf, jax.lax.max,
                                   (1, 1, POOL, POOL), (1, 1, POOL, POOL), "VALID")
    return skip, pooled


# ---------------------------------- main ------------------------------------
if __name__ == "__main__":
    key = jax.random.PRNGKey(0)
    keys = jax.random.split(key, 1 + 4 * NUM_CONV)
    x = jax.random.normal(keys[0], (2, C_IN, H, W), jnp.float32)

    layer_params = []
    cin = C_IN
    for l in range(NUM_CONV):
        kw_, kb_, kg_, kbe_ = keys[1 + 4 * l: 1 + 4 * (l + 1)]
        wt = 0.2 * jax.random.normal(kw_, (C_OUT, cin, 3, 3), jnp.float32)
        b = 0.1 * jax.random.normal(kb_, (C_OUT,), jnp.float32)
        g = 1.0 + 0.1 * jax.random.normal(kg_, (C_OUT,), jnp.float32)
        be = 0.1 * jax.random.normal(kbe_, (C_OUT,), jnp.float32)
        layer_params.append((wt, b, g, be))
        cin = C_OUT

    skip_ref, out_ref = down_block_reference(x, layer_params)

    # Default policy: ceil(N/2) samples/step (grid length 2 -> both v7x cores busy).
    skip, out = down_block_forward(x, layer_params)
    skip = jax.block_until_ready(skip)
    out = jax.block_until_ready(out)
    assert skip.shape == (2, C_OUT, H, W) and out.shape == (2, C_OUT, Ho, Wo)
    assert jnp.allclose(skip, skip_ref, atol=1e-3, rtol=1e-3), "skip mismatch (B=1 path)"
    assert jnp.allclose(out, out_ref, atol=1e-3, rtol=1e-3), "pooled mismatch (B=1 path)"

    # Lane-stacked path: whole batch in one grid step (max amortization on v5e/v6e).
    skip2, out2 = down_block_forward(x, layer_params, samples_per_step=2)
    skip2 = jax.block_until_ready(skip2)
    out2 = jax.block_until_ready(out2)
    assert jnp.allclose(skip2, skip_ref, atol=1e-3, rtol=1e-3), "skip mismatch (B=2 path)"
    assert jnp.allclose(out2, out_ref, atol=1e-3, rtol=1e-3), "pooled mismatch (B=2 path)"

    print("KERNEL_OK")
</pallas_src>

<mosaic_0001>
module attributes {stable_mosaic.version = 11 : i64} {
  func.func @probe(%arg0: memref<8x128xf32, #tpu.memory_space<vmem>>, %arg1: memref<8x128xf32, #tpu.memory_space<vmem>>) attributes {dimension_semantics = [], scalar_prefetch = 0 : i64, scratch_operands = 0 : i64, tpu.core_type = #tpu.core_type<tc>} {
    %c0 = arith.constant 0 : index
    %c0_0 = arith.constant 0 : index
    %0 = vector.load %arg0[%c0, %c0_0] : memref<8x128xf32, #tpu.memory_space<vmem>>, vector<8x128xf32>
    %c1_i32 = arith.constant 1 : i32
    %1 = tpu.dynamic_rotate %0 by %c1_i32 dim 1 : vector<8x128xf32>, i32 -> vector<8x128xf32>
    %c0_1 = arith.constant 0 : index
    %c0_2 = arith.constant 0 : index
    %2 = vector.load %arg1[%c0_1, %c0_2] : memref<8x128xf32, #tpu.memory_space<vmem>>, vector<8x128xf32>
    tpu.vector_store %arg1[%c0_1, %c0_2], %1 {strides = array<i32>} : memref<8x128xf32, #tpu.memory_space<vmem>>, vector<8x128xf32>,
    return
  }
}

module attributes {stable_mosaic.version = 11 : i64} {
  func.func @_down_block_kernel(%arg0: i32, %arg1: memref<1x8x256xf32, #tpu.memory_space<vmem>>, %arg2: memref<9x256xf32, #tpu.memory_space<vmem>>, %arg3: memref<256x1xf32, #tpu.memory_space<vmem>>, %arg4: memref<1x256xf32, #tpu.memory_space<vmem>>, %arg5: memref<256x64xf32, #tpu.memory_space<vmem>>, %arg6: memref<8x72xf32, #tpu.memory_space<vmem>>, %arg7: memref<8x1xf32, #tpu.memory_space<vmem>>, %arg8: memref<8x1xf32, #tpu.memory_space<vmem>>, %arg9: memref<8x72xf32, #tpu.memory_space<vmem>>, %arg10: memref<8x1xf32, #tpu.memory_space<vmem>>, %arg11: memref<8x1xf32, #tpu.memory_space<vmem>>, %arg12: memref<1x8x256xf32, #tpu.memory_space<vmem>>, %arg13: memref<1x8x64xf32, #tpu.memory_space<vmem>>) attributes {dimension_semantics = [#tpu.dimension_semantics<parallel>], iteration_bounds = array<i64: 2>, scalar_prefetch = 0 : i64, scratch_operands = 0 : i64, tpu.core_type = #tpu.core_type<tc>, window_params = [{transform_indices = @transform_0, window_bounds = array<i64: 1, 8, 256>}, {pipeline_mode = #tpu.pipeline_mode<synchronous>, transform_indices = @transform_1, window_bounds = array<i64: 9, 256>}, {pipeline_mode = #tpu.pipeline_mode<synchronous>, transform_indices = @transform_2, window_bounds = array<i64: 256, 1>}, {pipeline_mode = #tpu.pipeline_mode<synchronous>, transform_indices = @transform_3, window_bounds = array<i64: 1, 256>}, {pipeline_mode = #tpu.pipeline_mode<synchronous>, transform_indices = @transform_4, window_bounds = array<i64: 256, 64>}, {pipeline_mode = #tpu.pipeline_mode<synchronous>, transform_indices = @transform_5, window_bounds = array<i64: 8, 72>}, {pipeline_mode = #tpu.pipeline_mode<synchronous>, transform_indices = @transform_6, window_bounds = array<i64: 8, 1>}, {pipeline_mode = #tpu.pipeline_mode<synchronous>, transform_indices = @transform_7, window_bounds = array<i64: 8, 1>}, {pipeline_mode = #tpu.pipeline_mode<synchronous>, transform_indices = @transform_8, window_bounds = array<i64: 8, 72>}, {pipeline_mode = #tpu.pipeline_mode<synchronous>, transform_indices = @transform_9, window_bounds = array<i64: 8, 1>}, {pipeline_mode = #tpu.pipeline_mode<synchronous>, transform_indices = @transform_10, window_bounds = array<i64: 8, 1>}, {transform_indices = @transform_11, window_bounds = array<i64: 1, 8, 256>}, {transform_indices = @transform_12, window_bounds = array<i64: 1, 8, 64>}]} {
    %c0 = arith.constant 0 : index
    %c0_0 = arith.constant 0 : index
    %c0_1 = arith.constant 0 : index
    %0 = vector.load %arg1[%c0, %c0_0, %c0_1] : memref<1x8x256xf32, #tpu.memory_space<vmem>>, vector<1x8x256xf32>
    %1 = vector.shape_cast %0 : vector<1x8x256xf32> to vector<8x256xf32>
    %2 = vector.extract_strided_slice %1 {offsets = [0, 239], sizes = [8, 17], strides = [1, 1]} : vector<8x256xf32> to vector<8x17xf32>
    %3 = vector.extract_strided_slice %1 {offsets = [0, 0], sizes = [8, 239], strides = [1, 1]} : vector<8x256xf32> to vector<8x239xf32>
    %4 = tpu.concatenate %2, %3 in 1 : vector<8x17xf32>, vector<8x239xf32> -> vector<8x256xf32>
    %c0_2 = arith.constant 0 : index
    %c0_3 = arith.constant 0 : index
    %5 = vector.load %arg2[%c0_2, %c0_3] : memref<9x256xf32, #tpu.memory_space<vmem>>, vector<1x256xf32>
    %6 = vector.broadcast %5 : vector<1x256xf32> to vector<8x256xf32>
    %7 = arith.mulf %4, %6 : vector<8x256xf32>
    %8 = vector.extract_strided_slice %1 {offsets = [0, 240], sizes = [8, 16], strides = [1, 1]} : vector<8x256xf32> to vector<8x16xf32>
    %9 = vector.extract_strided_slice %1 {offsets = [0, 0], sizes = [8, 240], strides = [1, 1]} : vector<8x256xf32> to vector<8x240xf32>
    %10 = tpu.concatenate %8, %9 in 1 : vector<8x16xf32>, vector<8x240xf32> -> vector<8x256xf32>
    %c1 = arith.constant 1 : index
    %c0_4 = arith.constant 0 : index
    %11 = vector.load %arg2[%c1, %c0_4] : memref<9x256xf32, #tpu.memory_space<vmem>>, vector<1x256xf32>
    %12 = vector.broadcast %11 : vector<1x256xf32> to vector<8x256xf32>
    %13 = arith.mulf %10, %12 : vector<8x256xf32>
    %14 = vector.extract_strided_slice %1 {offsets = [0, 241], sizes = [8, 15], strides = [1, 1]} : vector<8x256xf32> to vector<8x15xf32>
    %15 = vector.extract_strided_slice %1 {offsets = [0, 0], sizes = [8, 241], strides = [1, 1]} : vector<8x256xf32> to vector<8x241xf32>
    %16 = tpu.concatenate %14, %15 in 1 : vector<8x15xf32>, vector<8x241xf32> -> vector<8x256xf32>
    %c2 = arith.constant 2 : index
    %c0_5 = arith.constant 0 : index
    %17 = vector.load %arg2[%c2, %c0_5] : memref<9x256xf32, #tpu.memory_space<vmem>>, vector<1x256xf32>
    %18 = vector.broadcast %17 : vector<1x256xf32> to vector<8x256xf32>
    %19 = arith.mulf %16, %18 : vector<8x256xf32>
    %20 = vector.extract_strided_slice %1 {offsets = [0, 255], sizes = [8, 1], strides = [1, 1]} : vector<8x256xf32> to vector<8x1xf32>
    %21 = vector.extract_strided_slice %1 {offsets = [0, 0], sizes = [8, 255], strides = [1, 1]} : vector<8x256xf32> to vector<8x255xf32>
    %22 = tpu.concatenate %20, %21 in 1 : vector<8x1xf32>, vector<8x255xf32> -> vector<8x256xf32>
    %c3 = arith.constant 3 : index
    %c0_6 = arith.constant 0 : index
    %23 = vector.load %arg2[%c3, %c0_6] : memref<9x256xf32, #tpu.memory_space<vmem>>, vector<1x256xf32>
    %24 = vector.broadcast %23 : vector<1x256xf32> to vector<8x256xf32>
    %25 = arith.mulf %22, %24 : vector<8x256xf32>
    %26 = vector.extract_strided_slice %1 {offsets = [0, 1], sizes = [8, 255], strides = [1, 1]} : vector<8x256xf32> to vector<8x255xf32>
    %27 = vector.extract_strided_slice %1 {offsets = [0, 0], sizes = [8, 1], strides = [1, 1]} : vector<8x256xf32> to vector<8x1xf32>
    %28 = tpu.concatenate %26, %27 in 1 : vector<8x255xf32>, vector<8x1xf32> -> vector<8x256xf32>
    %c5 = arith.constant 5 : index
    %c0_7 = arith.constant 0 : index
    %29 = vector.load %arg2[%c5, %c0_7] : memref<9x256xf32, #tpu.memory_space<vmem>>, vector<1x256xf32>
    %30 = vector.broadcast %29 : vector<1x256xf32> to vector<8x256xf32>
    %31 = arith.mulf %28, %30 : vector<8x256xf32>
    %32 = vector.extract_strided_slice %1 {offsets = [0, 15], sizes = [8, 241], strides = [1, 1]} : vector<8x256xf32> to vector<8x241xf32>
    %33 = vector.extract_strided_slice %1 {offsets = [0, 0], sizes = [8, 15], strides = [1, 1]} : vector<8x256xf32> to vector<8x15xf32>
    %34 = tpu.concatenate %32, %33 in 1 : vector<8x241xf32>, vector<8x15xf32> -> vector<8x256xf32>
    %c6 = arith.constant 6 : index
    %c0_8 = arith.constant 0 : index
    %35 = vector.load %arg2[%c6, %c0_8] : memref<9x256xf32, #tpu.memory_space<vmem>>, vector<1x256xf32>
    %36 = vector.broadcast %35 : vector<1x256xf32> to vector<8x256xf32>
    %37 = arith.mulf %34, %36 : vector<8x256xf32>
    %38 = vector.extract_strided_slice %1 {offsets = [0, 16], sizes = [8, 240], strides = [1, 1]} : vector<8x256xf32> to vector<8x240xf32>
    %39 = vector.extract_strided_slice %1 {offsets = [0, 0], sizes = [8, 16], strides = [1, 1]} : vector<8x256xf32> to vector<8x16xf32>
    %40 = tpu.concatenate %38, %39 in 1 : vector<8x240xf32>, vector<8x16xf32> -> vector<8x256xf32>
    %c7 = arith.constant 7 : index
    %c0_9 = arith.constant 0 : index
    %41 = vector.load %arg2[%c7, %c0_9] : memref<9x256xf32, #tpu.memory_space<vmem>>, vector<1x256xf32>
    %42 = vector.broadcast %41 : vector<1x256xf32> to vector<8x256xf32>
    %43 = arith.mulf %40, %42 : vector<8x256xf32>
    %44 = vector.extract_strided_slice %1 {offsets = [0, 17], sizes = [8, 239], strides = [1, 1]} : vector<8x256xf32> to vector<8x239xf32>
    %45 = vector.extract_strided_slice %1 {offsets = [0, 0], sizes = [8, 17], strides = [1, 1]} : vector<8x256xf32> to vector<8x17xf32>
    %46 = tpu.concatenate %44, %45 in 1 : vector<8x239xf32>, vector<8x17xf32> -> vector<8x256xf32>
    %c8 = arith.constant 8 : index
    %c0_10 = arith.constant 0 : index
    %47 = vector.load %arg2[%c8, %c0_10] : memref<9x256xf32, #tpu.memory_space<vmem>>, vector<1x256xf32>
    %48 = vector.broadcast %47 : vector<1x256xf32> to vector<8x256xf32>
    %49 = arith.mulf %46, %48 : vector<8x256xf32>
    %50 = tpu.concatenate %7, %13, %19, %25, %1, %31, %37, %43, %49 in 0 : vector<8x256xf32>, vector<8x256xf32>, vector<8x256xf32>, vector<8x256xf32>, vector<8x256xf32>, vector<8x256xf32>, vector<8x256xf32>, vector<8x256xf32>, vector<8x256xf32> -> vector<72x256xf32>
    %c0_11 = arith.constant 0 : index
    %c0_12 = arith.constant 0 : index
    %51 = vector.load %arg6[%c0_11, %c0_12] : memref<8x72xf32, #tpu.memory_space<vmem>>, vector<8x72xf32>
    %cst = arith.constant dense<0.000000e+00> : vector<8x256xf32>
    %52 = tpu.matmul %51, %50, %cst {dimension_numbers = #tpu.dot_dimension_numbers<[1], [0], [0], [1], [0, 0, 1, 1], [], []>} : vector<8x72xf32>, vector<72x256xf32>, vector<8x256xf32> -> vector<8x256xf32>
    %cst_13 = arith.constant dense<0.000000e+00> : vector<8xf32>
    %53 = vector.multi_reduction <add>, %52, %cst_13 [1] : vector<8x256xf32> to vector<8xf32>
    %54 = vector.shape_cast %53 : vector<8xf32> to vector<8x1xf32>
    %55 = arith.mulf %52, %52 : vector<8x256xf32>
    %cst_14 = arith.constant dense<0.000000e+00> : vector<8xf32>
    %56 = vector.multi_reduction <add>, %55, %cst_14 [1] : vector<8x256xf32> to vector<8xf32>
    %57 = vector.shape_cast %56 : vector<8xf32> to vector<8x1xf32>
    %cst_15 = arith.constant 3.906250e-03 : f32
    %58 = vector.broadcast %cst_15 : f32 to vector<8x1xf32>
    %59 = arith.mulf %54, %58 : vector<8x1xf32>
    %cst_16 = arith.constant 3.906250e-03 : f32
    %60 = vector.broadcast %cst_16 : f32 to vector<8x1xf32>
    %61 = arith.mulf %57, %60 : vector<8x1xf32>
    %62 = arith.mulf %59, %59 : vector<8x1xf32>
    %63 = arith.subf %61, %62 : vector<8x1xf32>
    %cst_17 = arith.constant 9.99999974E-6 : f32
    %64 = vector.broadcast %cst_17 : f32 to vector<8x1xf32>
    %65 = arith.addf %63, %64 : vector<8x1xf32>
    %66 = math.rsqrt %65 : vector<8x1xf32>
    %c0_18 = arith.constant 0 : index
    %c0_19 = arith.constant 0 : index
    %67 = vector.load %arg7[%c0_18, %c0_19] : memref<8x1xf32, #tpu.memory_space<vmem>>, vector<8x1xf32>
    %68 = arith.mulf %66, %67 : vector<8x1xf32>
    %c0_20 = arith.constant 0 : index
    %c0_21 = arith.constant 0 : index
    %69 = vector.load %arg8[%c0_20, %c0_21] : memref<8x1xf32, #tpu.memory_space<vmem>>, vector<8x1xf32>
    %70 = arith.mulf %59, %68 : vector<8x1xf32>
    %71 = arith.subf %69, %70 : vector<8x1xf32>
    %72 = vector.broadcast %68 : vector<8x1xf32> to vector<8x256xf32>
    %73 = arith.mulf %52, %72 : vector<8x256xf32>
    %74 = vector.broadcast %71 : vector<8x1xf32> to vector<8x256xf32>
    %75 = arith.addf %73, %74 : vector<8x256xf32>
    %cst_22 = arith.constant 0.00999999977 : f32
    %76 = vector.broadcast %cst_22 : f32 to vector<8x256xf32>
    %77 = arith.mulf %76, %75 : vector<8x256xf32>
    %78 = arith.maximumf %75, %77 : vector<8x256xf32>
    %79 = vector.extract_strided_slice %78 {offsets = [0, 239], sizes = [8, 17], strides = [1, 1]} : vector<8x256xf32> to vector<8x17xf32>
    %80 = vector.extract_strided_slice %78 {offsets = [0, 0], sizes = [8, 239], strides = [1, 1]} : vector<8x256xf32> to vector<8x239xf32>
    %81 = tpu.concatenate %79, %80 in 1 : vector<8x17xf32>, vector<8x239xf32> -> vector<8x256xf32>
    %c0_23 = arith.constant 0 : index
    %c0_24 = arith.constant 0 : index
    %82 = vector.load %arg2[%c0_23, %c0_24] : memref<9x256xf32, #tpu.memory_space<vmem>>, vector<1x256xf32>
    %83 = vector.broadcast %82 : vector<1x256xf32> to vector<8x256xf32>
    %84 = arith.mulf %81, %83 : vector<8x256xf32>
    %85 = vector.extract_strided_slice %78 {offsets = [0, 240], sizes = [8, 16], strides = [1, 1]} : vector<8x256xf32> to vector<8x16xf32>
    %86 = vector.extract_strided_slice %78 {offsets = [0, 0], sizes = [8, 240], strides = [1, 1]} : vector<8x256xf32> to vector<8x240xf32>
    %87 = tpu.concatenate %85, %86 in 1 : vector<8x16xf32>, vector<8x240xf32> -> vector<8x256xf32>
    %c1_25 = arith.constant 1 : index
    %c0_26 = arith.constant 0 : index
    %88 = vector.load %arg2[%c1_25, %c0_26] : memref<9x256xf32, #tpu.memory_space<vmem>>, vector<1x256xf32>
    %89 = vector.broadcast %88 : vector<1x256xf32> to vector<8x256xf32>
    %90 = arith.mulf %87, %89 : vector<8x256xf32>
    %91 = vector.extract_strided_slice %78 {offsets = [0, 241], sizes = [8, 15], strides = [1, 1]} : vector<8x256xf32> to vector<8x15xf32>
    %92 = vector.extract_strided_slice %78 {offsets = [0, 0], sizes = [8, 241], strides = [1, 1]} : vector<8x256xf32> to vector<8x241xf32>
    %93 = tpu.concatenate %91, %92 in 1 : vector<8x15xf32>, vector<8x241xf32> -> vector<8x256xf32>
    %c2_27 = arith.constant 2 : index
    %c0_28 = arith.constant 0 : index
    %94 = vector.load %arg2[%c2_27, %c0_28] : memref<9x256xf32, #tpu.memory_space<vmem>>, vector<1x256xf32>
    %95 = vector.broadcast %94 : vector<1x256xf32> to vector<8x256xf32>
    %96 = arith.mulf %93, %95 : vector<8x256xf32>
    %97 = vector.extract_strided_slice %78 {offsets = [0, 255], sizes = [8, 1], strides = [1, 1]} : vector<8x256xf32> to vector<8x1xf32>
    %98 = vector.extract_strided_slice %78 {offsets = [0, 0], sizes = [8, 255], strides = [1, 1]} : vector<8x256xf32> to vector<8x255xf32>
    %99 = tpu.concatenate %97, %98 in 1 : vector<8x1xf32>, vector<8x255xf32> -> vector<8x256xf32>
    %c3_29 = arith.constant 3 : index
    %c0_30 = arith.constant 0 : index
    %100 = vector.load %arg2[%c3_29, %c0_30] : memref<9x256xf32, #tpu.memory_space<vmem>>, vector<1x256xf32>
    %101 = vector.broadcast %100 : vector<1x256xf32> to vector<8x256xf32>
    %102 = arith.mulf %99, %101 : vector<8x256xf32>
    %103 = vector.extract_strided_slice %78 {offsets = [0, 1], sizes = [8, 255], strides = [1, 1]} : vector<8x256xf32> to vector<8x255xf32>
    %104 = vector.extract_strided_slice %78 {offsets = [0, 0], sizes = [8, 1], strides = [1, 1]} : vector<8x256xf32> to vector<8x1xf32>
    %105 = tpu.concatenate %103, %104 in 1 : vector<8x255xf32>, vector<8x1xf32> -> vector<8x256xf32>
    %c5_31 = arith.constant 5 : index
    %c0_32 = arith.constant 0 : index
    %106 = vector.load %arg2[%c5_31, %c0_32] : memref<9x256xf32, #tpu.memory_space<vmem>>, vector<1x256xf32>
    %107 = vector.broadcast %106 : vector<1x256xf32> to vector<8x256xf32>
    %108 = arith.mulf %105, %107 : vector<8x256xf32>
    %109 = vector.extract_strided_slice %78 {offsets = [0, 15], sizes = [8, 241], strides = [1, 1]} : vector<8x256xf32> to vector<8x241xf32>
    %110 = vector.extract_strided_slice %78 {offsets = [0, 0], sizes = [8, 15], strides = [1, 1]} : vector<8x256xf32> to vector<8x15xf32>
    %111 = tpu.concatenate %109, %110 in 1 : vector<8x241xf32>, vector<8x15xf32> -> vector<8x256xf32>
    %c6_33 = arith.constant 6 : index
    %c0_34 = arith.constant 0 : index
    %112 = vector.load %arg2[%c6_33, %c0_34] : memref<9x256xf32, #tpu.memory_space<vmem>>, vector<1x256xf32>
    %113 = vector.broadcast %112 : vector<1x256xf32> to vector<8x256xf32>
    %114 = arith.mulf %111, %113 : vector<8x256xf32>
    %115 = vector.extract_strided_slice %78 {offsets = [0, 16], sizes = [8, 240], strides = [1, 1]} : vector<8x256xf32> to vector<8x240xf32>
    %116 = vector.extract_strided_slice %78 {offsets = [0, 0], sizes = [8, 16], strides = [1, 1]} : vector<8x256xf32> to vector<8x16xf32>
    %117 = tpu.concatenate %115, %116 in 1 : vector<8x240xf32>, vector<8x16xf32> -> vector<8x256xf32>
    %c7_35 = arith.constant 7 : index
    %c0_36 = arith.constant 0 : index
    %118 = vector.load %arg2[%c7_35, %c0_36] : memref<9x256xf32, #tpu.memory_space<vmem>>, vector<1x256xf32>
    %119 = vector.broadcast %118 : vector<1x256xf32> to vector<8x256xf32>
    %120 = arith.mulf %117, %119 : vector<8x256xf32>
    %121 = vector.extract_strided_slice %78 {offsets = [0, 17], sizes = [8, 239], strides = [1, 1]} : vector<8x256xf32> to vector<8x239xf32>
    %122 = vector.extract_strided_slice %78 {offsets = [0, 0], sizes = [8, 17], strides = [1, 1]} : vector<8x256xf32> to vector<8x17xf32>
    %123 = tpu.concatenate %121, %122 in 1 : vector<8x239xf32>, vector<8x17xf32> -> vector<8x256xf32>
    %c8_37 = arith.constant 8 : index
    %c0_38 = arith.constant 0 : index
    %124 = vector.load %arg2[%c8_37, %c0_38] : memref<9x256xf32, #tpu.memory_space<vmem>>, vector<1x256xf32>
    %125 = vector.broadcast %124 : vector<1x256xf32> to vector<8x256xf32>
    %126 = arith.mulf %123, %125 : vector<8x256xf32>
    %127 = tpu.concatenate %84, %90, %96, %102, %78, %108, %114, %120, %126 in 0 : vector<8x256xf32>, vector<8x256xf32>, vector<8x256xf32>, vector<8x256xf32>, vector<8x256xf32>, vector<8x256xf32>, vector<8x256xf32>, vector<8x256xf32>, vector<8x256xf32> -> vector<72x256xf32>
    %c0_39 = arith.constant 0 : index
    %c0_40 = arith.constant 0 : index
    %128 = vector.load %arg9[%c0_39, %c0_40] : memref<8x72xf32, #tpu.memory_space<vmem>>, vector<8x72xf32>
    %cst_41 = arith.constant dense<0.000000e+00> : vector<8x256xf32>
    %129 = tpu.matmul %128, %127, %cst_41 {dimension_numbers = #tpu.dot_dimension_numbers<[1], [0], [0], [1], [0, 0, 1, 1], [], []>} : vector<8x72xf32>, vector<72x256xf32>, vector<8x256xf32> -> vector<8x256xf32>
    %cst_42 = arith.constant dense<0.000000e+00> : vector<8xf32>
    %130 = vector.multi_reduction <add>, %129, %cst_42 [1] : vector<8x256xf32> to vector<8xf32>
    %131 = vector.shape_cast %130 : vector<8xf32> to vector<8x1xf32>
    %132 = arith.mulf %129, %129 : vector<8x256xf32>
    %cst_43 = arith.constant dense<0.000000e+00> : vector<8xf32>
    %133 = vector.multi_reduction <add>, %132, %cst_43 [1] : vector<8x256xf32> to vector<8xf32>
    %134 = vector.shape_cast %133 : vector<8xf32> to vector<8x1xf32>
    %cst_44 = arith.constant 3.906250e-03 : f32
    %135 = vector.broadcast %cst_44 : f32 to vector<8x1xf32>
    %136 = arith.mulf %131, %135 : vector<8x1xf32>
    %cst_45 = arith.constant 3.906250e-03 : f32
    %137 = vector.broadcast %cst_45 : f32 to vector<8x1xf32>
    %138 = arith.mulf %134, %137 : vector<8x1xf32>
    %139 = arith.mulf %136, %136 : vector<8x1xf32>
    %140 = arith.subf %138, %139 : vector<8x1xf32>
    %cst_46 = arith.constant 9.99999974E-6 : f32
    %141 = vector.broadcast %cst_46 : f32 to vector<8x1xf32>
    %142 = arith.addf %140, %141 : vector<8x1xf32>
    %143 = math.rsqrt %142 : vector<8x1xf32>
    %c0_47 = arith.constant 0 : index
    %c0_48 = arith.constant 0 : index
    %144 = vector.load %arg10[%c0_47, %c0_48] : memref<8x1xf32, #tpu.memory_space<vmem>>, vector<8x1xf32>
    %145 = arith.mulf %143, %144 : vector<8x1xf32>
    %c0_49 = arith.constant 0 : index
    %c0_50 = arith.constant 0 : index
    %146 = vector.load %arg11[%c0_49, %c0_50] : memref<8x1xf32, #tpu.memory_space<vmem>>, vector<8x1xf32>
    %147 = arith.mulf %136, %145 : vector<8x1xf32>
    %148 = arith.subf %146, %147 : vector<8x1xf32>
    %149 = vector.broadcast %145 : vector<8x1xf32> to vector<8x256xf32>
    %150 = arith.mulf %129, %149 : vector<8x256xf32>
    %151 = vector.broadcast %148 : vector<8x1xf32> to vector<8x256xf32>
    %152 = arith.addf %150, %151 : vector<8x256xf32>
    %cst_51 = arith.constant 0.00999999977 : f32
    %153 = vector.broadcast %cst_51 : f32 to vector<8x256xf32>
    %154 = arith.mulf %153, %152 : vector<8x256xf32>
    %155 = arith.maximumf %152, %154 : vector<8x256xf32>
    %c0_52 = arith.constant 0 : index
    %c0_53 = arith.constant 0 : index
    %c0_54 = arith.constant 0 : index
    %156 = vector.load %arg12[%c0_52, %c0_53, %c0_54] : memref<1x8x256xf32, #tpu.memory_space<vmem>>, vector<1x8x256xf32>
    %157 = vector.shape_cast %156 : vector<1x8x256xf32> to vector<8x256xf32>
    %158 = vector.shape_cast %155 : vector<8x256xf32> to vector<1x8x256xf32>
    tpu.vector_store %arg12[%c0_52, %c0_53, %c0_54], %158 {strides = array<i32>} : memref<1x8x256xf32, #tpu.memory_space<vmem>>, vector<1x8x256xf32>,
    %159 = vector.extract_strided_slice %155 {offsets = [0, 1], sizes = [8, 255], strides = [1, 1]} : vector<8x256xf32> to vector<8x255xf32>
    %160 = vector.extract_strided_slice %155 {offsets = [0, 0], sizes = [8, 1], strides = [1, 1]} : vector<8x256xf32> to vector<8x1xf32>
    %161 = tpu.concatenate %159, %160 in 1 : vector<8x255xf32>, vector<8x1xf32> -> vector<8x256xf32>
    %162 = arith.maximumf %155, %161 : vector<8x256xf32>
    %163 = vector.extract_strided_slice %162 {offsets = [0, 16], sizes = [8, 240], strides = [1, 1]} : vector<8x256xf32> to vector<8x240xf32>
    %164 = vector.extract_strided_slice %162 {offsets = [0, 0], sizes = [8, 16], strides = [1, 1]} : vector<8x256xf32> to vector<8x16xf32>
    %165 = tpu.concatenate %163, %164 in 1 : vector<8x240xf32>, vector<8x16xf32> -> vector<8x256xf32>
    %166 = arith.maximumf %162, %165 : vector<8x256xf32>
    %c0_55 = arith.constant 0 : index
    %c0_56 = arith.constant 0 : index
    %167 = vector.load %arg5[%c0_55, %c0_56] : memref<256x64xf32, #tpu.memory_space<vmem>>, vector<256x64xf32>
    %cst_57 = arith.constant dense<0.000000e+00> : vector<8x64xf32>
    %168 = tpu.matmul %166, %167, %cst_57 {dimension_numbers = #tpu.dot_dimension_numbers<[1], [0], [0], [1], [0, 0, 1, 1], [], []>} : vector<8x256xf32>, vector<256x64xf32>, vector<8x64xf32> -> vector<8x64xf32>
    %c0_58 = arith.constant 0 : index
    %c0_59 = arith.constant 0 : index
    %c0_60 = arith.constant 0 : index
    %169 = vector.load %arg13[%c0_58, %c0_59, %c0_60] : memref<1x8x64xf32, #tpu.memory_space<vmem>>, vector<1x8x64xf32>
    %170 = vector.shape_cast %169 : vector<1x8x64xf32> to vector<8x64xf32>
    %171 = vector.shape_cast %168 : vector<8x64xf32> to vector<1x8x64xf32>
    tpu.vector_store %arg13[%c0_58, %c0_59, %c0_60], %171 {strides = array<i32>} : memref<1x8x64xf32, #tpu.memory_space<vmem>>, vector<1x8x64xf32>,
    return
  }
  func.func @transform_0(%arg0: i32) -> (i32, i32, i32) {
    %c0_i32 = arith.constant 0 : i32
    %c0_i32_0 = arith.constant 0 : i32
    %c0_i32_1 = arith.constant 0 : i32
    return %arg0, %c0_i32, %c0_i32_0 : i32, i32, i32
  }
  func.func @transform_1(%arg0: i32) -> (i32, i32) {
    %c0_i32 = arith.constant 0 : i32
    %c0_i32_0 = arith.constant 0 : i32
    %c0_i32_1 = arith.constant 0 : i32
    return %c0_i32, %c0_i32_0 : i32, i32
  }
  func.func @transform_2(%arg0: i32) -> (i32, i32) {
    %c0_i32 = arith.constant 0 : i32
    %c0_i32_0 = arith.constant 0 : i32
    %c0_i32_1 = arith.constant 0 : i32
    return %c0_i32, %c0_i32_0 : i32, i32
  }
  func.func @transform_3(%arg0: i32) -> (i32, i32) {
    %c0_i32 = arith.constant 0 : i32
    %c0_i32_0 = arith.constant 0 : i32
    %c0_i32_1 = arith.constant 0 : i32
    return %c0_i32, %c0_i32_0 : i32, i32
  }
  func.func @transform_4(%arg0: i32) -> (i32, i32) {
    %c0_i32 = arith.constant 0 : i32
    %c0_i32_0 = arith.constant 0 : i32
    %c0_i32_1 = arith.constant 0 : i32
    return %c0_i32, %c0_i32_0 : i32, i32
  }
  func.func @transform_5(%arg0: i32) -> (i32, i32) {
    %c0_i32 = arith.constant 0 : i32
    %c0_i32_0 = arith.constant 0 : i32
    %c0_i32_1 = arith.constant 0 : i32
    return %c0_i32, %c0_i32_0 : i32, i32
  }
  func.func @transform_6(%arg0: i32) -> (i32, i32) {
    %c0_i32 = arith.constant 0 : i32
    %c0_i32_0 = arith.constant 0 : i32
    %c0_i32_1 = arith.constant 0 : i32
    return %c0_i32, %c0_i32_0 : i32, i32
  }
  func.func @transform_7(%arg0: i32) -> (i32, i32) {
    %c0_i32 = arith.constant 0 : i32
    %c0_i32_0 = arith.constant 0 : i32
    %c0_i32_1 = arith.constant 0 : i32
    return %c0_i32, %c0_i32_0 : i32, i32
  }
  func.func @transform_8(%arg0: i32) -> (i32, i32) {
    %c0_i32 = arith.constant 0 : i32
    %c0_i32_0 = arith.constant 0 : i32
    %c0_i32_1 = arith.constant 0 : i32
    return %c0_i32, %c0_i32_0 : i32, i32
  }
  func.func @transform_9(%arg0: i32) -> (i32, i32) {
    %c0_i32 = arith.constant 0 : i32
    %c0_i32_0 = arith.constant 0 : i32
    %c0_i32_1 = arith.constant 0 : i32
    return %c0_i32, %c0_i32_0 : i32, i32
  }
  func.func @transform_10(%arg0: i32) -> (i32, i32) {
    %c0_i32 = arith.constant 0 : i32
    %c0_i32_0 = arith.constant 0 : i32
    %c0_i32_1 = arith.constant 0 : i32
    return %c0_i32, %c0_i32_0 : i32, i32
  }
  func.func @transform_11(%arg0: i32) -> (i32, i32, i32) {
    %c0_i32 = arith.constant 0 : i32
    %c0_i32_0 = arith.constant 0 : i32
    %c0_i32_1 = arith.constant 0 : i32
    return %arg0, %c0_i32, %c0_i32_0 : i32, i32, i32
  }
  func.func @transform_12(%arg0: i32) -> (i32, i32, i32) {
    %c0_i32 = arith.constant 0 : i32
    %c0_i32_0 = arith.constant 0 : i32
    %c0_i32_1 = arith.constant 0 : i32
    return %arg0, %c0_i32, %c0_i32_0 : i32, i32, i32
  }
}

</mosaic_0001>

<llo_original>
// kernel: tpu_custom_call.1
$region0: #{tpu_custom_call.1}
  #allocation0 [shape = 'u32[]', space=smem, size = 0x4, offset = 0x4, fixed_abs, tag = 'smem constant byte address 0x4 - core index']
  #allocation1 [shape = 'u32[72,128]{1,0:T(1,128)}', space=vmem, size = 0x9000, scoped, tag = 'internal scratch']
  %s0 = inlined_call_operand.hbm [shape: f32[8,128], index: 0, kind: input, shape index: {}]
  %s1 = inlined_call_operand.hbm [shape: f32[8,128], index: 1, kind: output, shape index: {}]
  %s2 = sld [smem:[#allocation0]]
  $region18: #{tpu_custom_call.1} parent=0
    _
  %s4 = ssub.s32 1, %s2
  %s5 = scalar_select 0, %s4, %s2
  $region1: #{tpu_custom_call.1} parent=0
    #allocation2 [shape = 'u8[4096]{0}', space=vmem, size = 0x1000, scoped, tag = 'input window, operand 0, single buffered']
    #allocation3 [shape = 's32[1]{0}', space=sflag, size = 0x4, scoped, tag = 'scoped memory for tpu_custom_call.1']
    #allocation4 [shape = 's32[1]{0}', space=sflag, size = 0x4, scoped, tag = 'scoped memory for tpu_custom_call.1']
    #allocation5 [shape = 'u8[4096]{0}', space=vmem, size = 0x1000, scoped, tag = 'output window, operand 0, single buffered']
    %6 = vsyncpa [#allocation3], 0
    %7 = vsyncpa [#allocation4], 0
    // Predicated region
    $region2: #{tpu_custom_call.1} parent=1 // pred_check
      _
    $region3: #{tpu_custom_call.1} parent=1 // pred_check_branch
      %9 = sbr.rel (0) target = $region5
    $region4: #{tpu_custom_call.1} parent=1 // pred_region
      %11 = vsyncadd [#allocation3], 0
      %s13 = sshll.u32 %s0, 4
      %s14 = int_to_ptr.hbm [resolvable:$true] %s13
      %s15 = sshll.u32 [#allocation2], 4
      %s16 = int_to_ptr.vmem [resolvable:$true] %s15
      %18 = dma.hbm_to_vmem [thread:$0]  %s14, 128, %s16, [#allocation3]
    $region5: #{tpu_custom_call.1} parent=1 // pred_fallthru
      _
    // Predicated region
    $region6: #{tpu_custom_call.1} parent=1 // pred_check
      _
    $region7: #{tpu_custom_call.1} parent=1 // pred_check_branch
      %20 = sbr.rel (0) target = $region9
    $region8: #{tpu_custom_call.1} parent=1 // pred_region
      %22 = dma.done [#allocation3], 128
    $region9: #{tpu_custom_call.1} parent=1 // pred_fallthru
      _
    %v23 = vld [vmem:[#allocation2] sm:$0xff]
    %24 = vrot.lane.b32.xlu0 %v23, 1
    %v25 = vpop.permute.xlu0 %24
    %26 = vst [vmem:[#allocation5] sm:$0xff] %v25
    // Predicated region
    $region10: #{tpu_custom_call.1} parent=1 // pred_check
      _
    $region11: #{tpu_custom_call.1} parent=1 // pred_check_branch
      %28 = sbr.rel (0) target = $region13
    $region12: #{tpu_custom_call.1} parent=1 // pred_region
      %30 = vsyncadd [#allocation4], 0
      %s32 = sshll.u32 [#allocation5], 4
      %s33 = int_to_ptr.vmem [resolvable:$true] %s32
      %s34 = sshll.u32 %s1, 4
      %s35 = int_to_ptr.hbm [resolvable:$true] %s34
      %37 = dma.vmem_to_hbm [thread:$0]  %s33, 128, %s35, [#allocation4]
    $region13: #{tpu_custom_call.1} parent=1 // pred_fallthru
      _
    // Predicated region
    $region14: #{tpu_custom_call.1} parent=1 // pred_check
      _
    $region15: #{tpu_custom_call.1} parent=1 // pred_check_branch
      %39 = sbr.rel (0) target = $region17
    $region16: #{tpu_custom_call.1} parent=1 // pred_region
      %41 = dma.done [#allocation4], 128
    $region17: #{tpu_custom_call.1} parent=1 // pred_fallthru
      _
    %42 = vsyncpa [#allocation3], 1
    %43 = vsyncpa [#allocation4], 1

// kernel: _forward_impl.1
$region0: #{_forward_impl.1}
  #allocation0 [shape = 'u32[]', space=smem, size = 0x4, offset = 0x4, fixed_abs, tag = 'smem constant byte address 0x4 - core index']
  #allocation1 [shape = 'u32[72,128]{1,0:T(1,128)}', space=vmem, size = 0x9000, scoped, tag = 'internal scratch']
  %s0 = inlined_call_operand.vmem [shape: f32[2,8,256], index: 0, kind: input, shape index: {}]
  %s1 = inlined_call_operand.vmem [shape: f32[9,256], index: 1, kind: input, shape index: {}]
  %s2 = inlined_call_operand.vmem [shape: f32[256,1], index: 2, kind: input, shape index: {}]
  %s3 = inlined_call_operand.vmem [shape: f32[1,256], index: 3, kind: input, shape index: {}]
  %s4 = inlined_call_operand.vmem [shape: f32[256,64], index: 4, kind: input, shape index: {}]
  %s5 = inlined_call_operand.vmem [shape: f32[8,72], index: 5, kind: input, shape index: {}]
  %s6 = inlined_call_operand.vmem [shape: f32[8,1], index: 6, kind: input, shape index: {}]
  %s7 = inlined_call_operand.vmem [shape: f32[8,1], index: 7, kind: input, shape index: {}]
  %s8 = inlined_call_operand.vmem [shape: f32[8,72], index: 8, kind: input, shape index: {}]
  %s9 = inlined_call_operand.vmem [shape: f32[8,1], index: 9, kind: input, shape index: {}]
  %s10 = inlined_call_operand.vmem [shape: f32[8,1], index: 10, kind: input, shape index: {}]
  %s11 = inlined_call_operand.vmem [shape: f32[2,8,256], index: 11, kind: output, shape index: {0}]
  %s12 = inlined_call_operand.vmem [shape: f32[2,8,64], index: 12, kind: output, shape index: {1}]
  %13 = xla_tuple %s11, %s12
  %s14 = sld [smem:[#allocation0]]
  $region85: #{_forward_impl.1} parent=0
    _
  %s16 = ssub.s32 1, %s14
  %s17 = scalar_select 0, %s16, %s14
  loop: start=0, step=1, limit=4
  $region2: #{_forward_impl.1} parent=0 // loop_pre_header
    _
  $region3: #{_forward_impl.1} parent=0 // loop_header
    %s19 = sphi 0, %s23
    %p20 = scmp.ge.s32.totalorder %s19, 4
    %s29 = sphi 0, %s31
    %s32 = sphi 0, %s29
    %s33 = sphi 0, %s32
    %s49 = sphi 0, %s33
    %s53 = sphi 0, %s53
    %s55 = sphi 0, %s53
    %s56 = sphi 0, %s55
    %s70 = sphi 0, %s56
    %s74 = sphi 0, %s74
    %s76 = sphi 0, %s74
    %s77 = sphi 0, %s76
    %s91 = sphi 0, %s77
    %s95 = sphi 0, %s95
    %s97 = sphi 0, %s95
    %s98 = sphi 0, %s97
    %s112 = sphi 0, %s98
    %s116 = sphi 0, %s116
    %s118 = sphi 0, %s116
    %s119 = sphi 0, %s118
    %s133 = sphi 0, %s119
    %s137 = sphi 0, %s137
    %s139 = sphi 0, %s137
    %s140 = sphi 0, %s139
    %s154 = sphi 0, %s140
    %s158 = sphi 0, %s158
    %s160 = sphi 0, %s158
    %s161 = sphi 0, %s160
    %s175 = sphi 0, %s161
    %s179 = sphi 0, %s179
    %s181 = sphi 0, %s179
    %s182 = sphi 0, %s181
    %s196 = sphi 0, %s182
    %s200 = sphi 0, %s200
    %s202 = sphi 0, %s200
    %s203 = sphi 0, %s202
    %s217 = sphi 0, %s203
    %s221 = sphi 0, %s221
    %s223 = sphi 0, %s221
    %s224 = sphi 0, %s223
    %s238 = sphi 0, %s224
    %s242 = sphi 0, %s242
    %s244 = sphi 0, %s242
    %s245 = sphi 0, %s244
    %s259 = sphi 0, %s245
    %s265 = sphi 0, %s267
    %s268 = sphi 0, %s265
    %s269 = sphi 0, %s268
    %s285 = sphi 0, %s269
    %s291 = sphi 0, %s293
    %s294 = sphi 0, %s291
    %s295 = sphi 0, %s294
    %s311 = sphi 0, %s295
  $region4: #{_forward_impl.1} parent=0 // loop_header_branch
    %22 = sbr.rel (%p20) target = $region8
  $region5: #{_forward_impl.1} parent=0 // loop_body
    %s24 = ssub.s32 %s19, 1
    %s25 = ssub.s32 %s19, 2
    %s26 = sadd.s32 %s19, 1
    %s27 = ssub.s32 %s19, %s26
    %p28 = scmp.eq.s32.totalorder %s27, 0
    %s30 = sadd.s32 %s29, 1
    %s31 = scalar_select %p28, %s29, %s30
    %p34 = pneg %p28
    %p35 = scmp.eq.s32.totalorder %s19, 1
    %p36 = por %p34, %p35
    %p37 = scmp.ne.s32.totalorder %s29, %s32
    %p38 = scmp.eq.s32.totalorder %s19, 0
    %p39 = por %p37, %p38
    %p40 = scmp.ne.s32.totalorder %s29, %s32
    %p41 = scmp.eq.s32.totalorder %s24, 1
    %p42 = por %p40, %p41
    %p43 = scmp.ne.s32.totalorder %s32, %s33
    %p44 = scmp.eq.s32.totalorder %s24, 0
    %p45 = por %p43, %p44
    %p46 = scmp.ne.s32.totalorder %s32, %s33
    %p47 = scmp.eq.s32.totalorder %s25, 1
    %p48 = por %p46, %p47
    %p50 = scmp.ne.s32.totalorder %s33, %s49
    %p51 = scmp.eq.s32.totalorder %s25, 0
    %p52 = por %p50, %p51
    %s54 = sadd.s32 %s53, 1
    %p57 = scmp.eq.s32.totalorder %s19, 1
    %p58 = scmp.ne.s32.totalorder %s53, %s55
    %p59 = scmp.eq.s32.totalorder %s19, 0
    %p60 = por %p58, %p59
    %p61 = scmp.ne.s32.totalorder %s53, %s55
    %p62 = scmp.eq.s32.totalorder %s24, 1
    %p63 = por %p61, %p62
    %p64 = scmp.ne.s32.totalorder %s55, %s56
    %p65 = scmp.eq.s32.totalorder %s24, 0
    %p66 = por %p64, %p65
    %p67 = scmp.ne.s32.totalorder %s55, %s56
    %p68 = scmp.eq.s32.totalorder %s25, 1
    %p69 = por %p67, %p68
    %p71 = scmp.ne.s32.totalorder %s56, %s70
    %p72 = scmp.eq.s32.totalorder %s25, 0
    %p73 = por %p71, %p72
    %s75 = sadd.s32 %s74, 1
    %p78 = scmp.eq.s32.totalorder %s19, 1
    %p79 = scmp.ne.s32.totalorder %s74, %s76
    %p80 = scmp.eq.s32.totalorder %s19, 0
    %p81 = por %p79, %p80
    %p82 = scmp.ne.s32.totalorder %s74, %s76
    %p83 = scmp.eq.s32.totalorder %s24, 1
    %p84 = por %p82, %p83
    %p85 = scmp.ne.s32.totalorder %s76, %s77
    %p86 = scmp.eq.s32.totalorder %s24, 0
    %p87 = por %p85, %p86
    %p88 = scmp.ne.s32.totalorder %s76, %s77
    %p89 = scmp.eq.s32.totalorder %s25, 1
    %p90 = por %p88, %p89
    %p92 = scmp.ne.s32.totalorder %s77, %s91
    %p93 = scmp.eq.s32.totalorder %s25, 0
    %p94 = por %p92, %p93
    %s96 = sadd.s32 %s95, 1
    %p99 = scmp.eq.s32.totalorder %s19, 1
    %p100 = scmp.ne.s32.totalorder %s95, %s97
    %p101 = scmp.eq.s32.totalorder %s19, 0
    %p102 = por %p100, %p101
    %p103 = scmp.ne.s32.totalorder %s95, %s97
    %p104 = scmp.eq.s32.totalorder %s24, 1
    %p105 = por %p103, %p104
    %p106 = scmp.ne.s32.totalorder %s97, %s98
    %p107 = scmp.eq.s32.totalorder %s24, 0
    %p108 = por %p106, %p107
    %p109 = scmp.ne.s32.totalorder %s97, %s98
    %p110 = scmp.eq.s32.totalorder %s25, 1
    %p111 = por %p109, %p110
    %p113 = scmp.ne.s32.totalorder %s98, %s112
    %p114 = scmp.eq.s32.totalorder %s25, 0
    %p115 = por %p113, %p114
    %s117 = sadd.s32 %s116, 1
    %p120 = scmp.eq.s32.totalorder %s19, 1
    %p121 = scmp.ne.s32.totalorder %s116, %s118
    %p122 = scmp.eq.s32.totalorder %s19, 0
    %p123 = por %p121, %p122
    %p124 = scmp.ne.s32.totalorder %s116, %s118
    %p125 = scmp.eq.s32.totalorder %s24, 1
    %p126 = por %p124, %p125
    %p127 = scmp.ne.s32.totalorder %s118, %s119
    %p128 = scmp.eq.s32.totalorder %s24, 0
    %p129 = por %p127, %p128
    %p130 = scmp.ne.s32.totalorder %s118, %s119
    %p131 = scmp.eq.s32.totalorder %s25, 1
    %p132 = por %p130, %p131
    %p134 = scmp.ne.s32.totalorder %s119, %s133
    %p135 = scmp.eq.s32.totalorder %s25, 0
    %p136 = por %p134, %p135
    %s138 = sadd.s32 %s137, 1
    %p141 = scmp.eq.s32.totalorder %s19, 1
    %p142 = scmp.ne.s32.totalorder %s137, %s139
    %p143 = scmp.eq.s32.totalorder %s19, 0
    %p144 = por %p142, %p143
    %p145 = scmp.ne.s32.totalorder %s137, %s139
    %p146 = scmp.eq.s32.totalorder %s24, 1
    %p147 = por %p145, %p146
    %p148 = scmp.ne.s32.totalorder %s139, %s140
    %p149 = scmp.eq.s32.totalorder %s24, 0
    %p150 = por %p148, %p149
    %p151 = scmp.ne.s32.totalorder %s139, %s140
    %p152 = scmp.eq.s32.totalorder %s25, 1
    %p153 = por %p151, %p152
    %p155 = scmp.ne.s32.totalorder %s140, %s154
    %p156 = scmp.eq.s32.totalorder %s25, 0
    %p157 = por %p155, %p156
    %s159 = sadd.s32 %s158, 1
    %p162 = scmp.eq.s32.totalorder %s19, 1
    %p163 = scmp.ne.s32.totalorder %s158, %s160
    %p164 = scmp.eq.s32.totalorder %s19, 0
    %p165 = por %p163, %p164
    %p166 = scmp.ne.s32.totalorder %s158, %s160
    %p167 = scmp.eq.s32.totalorder %s24, 1
    %p168 = por %p166, %p167
    %p169 = scmp.ne.s32.totalorder %s160, %s161
    %p170 = scmp.eq.s32.totalorder %s24, 0
    %p171 = por %p169, %p170
    %p172 = scmp.ne.s32.totalorder %s160, %s161
    %p173 = scmp.eq.s32.totalorder %s25, 1
    %p174 = por %p172, %p173
    %p176 = scmp.ne.s32.totalorder %s161, %s175
    %p177 = scmp.eq.s32.totalorder %s25, 0
    %p178 = por %p176, %p177
    %s180 = sadd.s32 %s179, 1
    %p183 = scmp.eq.s32.totalorder %s19, 1
    %p184 = scmp.ne.s32.totalorder %s179, %s181
    %p185 = scmp.eq.s32.totalorder %s19, 0
    %p186 = por %p184, %p185
    %p187 = scmp.ne.s32.totalorder %s179, %s181
    %p188 = scmp.eq.s32.totalorder %s24, 1
    %p189 = por %p187, %p188
    %p190 = scmp.ne.s32.totalorder %s181, %s182
    %p191 = scmp.eq.s32.totalorder %s24, 0
    %p192 = por %p190, %p191
    %p193 = scmp.ne.s32.totalorder %s181, %s182
    %p194 = scmp.eq.s32.totalorder %s25, 1
    %p195 = por %p193, %p194
    %p197 = scmp.ne.s32.totalorder %s182, %s196
    %p198 = scmp.eq.s32.totalorder %s25, 0
    %p199 = por %p197, %p198
    %s201 = sadd.s32 %s200, 1
    %p204 = scmp.eq.s32.totalorder %s19, 1
    %p205 = scmp.ne.s32.totalorder %s200, %s202
    %p206 = scmp.eq.s32.totalorder %s19, 0
    %p207 = por %p205, %p206
    %p208 = scmp.ne.s32.totalorder %s200, %s202
    %p209 = scmp.eq.s32.totalorder %s24, 1
    %p210 = por %p208, %p209
    %p211 = scmp.ne.s32.totalorder %s202, %s203
    %p212 = scmp.eq.s32.totalorder %s24, 0
    %p213 = por %p211, %p212
    %p214 = scmp.ne.s32.totalorder %s202, %s203
    %p215 = scmp.eq.s32.totalorder %s25, 1
    %p216 = por %p214, %p215
    %p218 = scmp.ne.s32.totalorder %s203, %s217
    %p219 = scmp.eq.s32.totalorder %s25, 0
    %p220 = por %p218, %p219
    %s222 = sadd.s32 %s221, 1
    %p225 = scmp.eq.s32.totalorder %s19, 1
    %p226 = scmp.ne.s32.totalorder %s221, %s223
    %p227 = scmp.eq.s32.totalorder %s19, 0
    %p228 = por %p226, %p227
    %p229 = scmp.ne.s32.totalorder %s221, %s223
    %p230 = scmp.eq.s32.totalorder %s24, 1
    %p231 = por %p229, %p230
    %p232 = scmp.ne.s32.totalorder %s223, %s224
    %p233 = scmp.eq.s32.totalorder %s24, 0
    %p234 = por %p232, %p233
    %p235 = scmp.ne.s32.totalorder %s223, %s224
    %p236 = scmp.eq.s32.totalorder %s25, 1
    %p237 = por %p235, %p236
    %p239 = scmp.ne.s32.totalorder %s224, %s238
    %p240 = scmp.eq.s32.totalorder %s25, 0
    %p241 = por %p239, %p240
    %s243 = sadd.s32 %s242, 1
    %p246 = scmp.eq.s32.totalorder %s19, 1
    %p247 = scmp.ne.s32.totalorder %s242, %s244
    %p248 = scmp.eq.s32.totalorder %s19, 0
    %p249 = por %p247, %p248
    %p250 = scmp.ne.s32.totalorder %s242, %s244
    %p251 = scmp.eq.s32.totalorder %s24, 1
    %p252 = por %p250, %p251
    %p253 = scmp.ne.s32.totalorder %s244, %s245
    %p254 = scmp.eq.s32.totalorder %s24, 0
    %p255 = por %p253, %p254
    %p256 = scmp.ne.s32.totalorder %s244, %s245
    %p257 = scmp.eq.s32.totalorder %s25, 1
    %p258 = por %p256, %p257
    %p260 = scmp.ne.s32.totalorder %s245, %s259
    %p261 = scmp.eq.s32.totalorder %s25, 0
    %p262 = por %p260, %p261
    %s263 = ssub.s32 %s19, %s26
    %p264 = scmp.eq.s32.totalorder %s263, 0
    %s266 = sadd.s32 %s265, 1
    %s267 = scalar_select %p264, %s265, %s266
    %p270 = pneg %p264
    %p271 = scmp.eq.s32.totalorder %s19, 1
    %p272 = por %p270, %p271
    %p273 = scmp.ne.s32.totalorder %s265, %s268
    %p274 = scmp.eq.s32.totalorder %s19, 0
    %p275 = por %p273, %p274
    %p276 = scmp.ne.s32.totalorder %s265, %s268
    %p277 = scmp.eq.s32.totalorder %s24, 1
    %p278 = por %p276, %p277
    %p279 = scmp.ne.s32.totalorder %s268, %s269
    %p280 = scmp.eq.s32.totalorder %s24, 0
    %p281 = por %p279, %p280
    %p282 = scmp.ne.s32.totalorder %s268, %s269
    %p283 = scmp.eq.s32.totalorder %s25, 1
    %p284 = por %p282, %p283
    %p286 = scmp.ne.s32.totalorder %s269, %s285
    %p287 = scmp.eq.s32.totalorder %s25, 0
    %p288 = por %p286, %p287
    %s289 = ssub.s32 %s19, %s26
    %p290 = scmp.eq.s32.totalorder %s289, 0
    %s292 = sadd.s32 %s291, 1
    %s293 = scalar_select %p290, %s291, %s292
    %p296 = pneg %p290
    %p297 = scmp.eq.s32.totalorder %s19, 1
    %p298 = por %p296, %p297
    %p299 = scmp.ne.s32.totalorder %s291, %s294
    %p300 = scmp.eq.s32.totalorder %s19, 0
    %p301 = por %p299, %p300
    %p302 = scmp.ne.s32.totalorder %s291, %s294
    %p303 = scmp.eq.s32.totalorder %s24, 1
    %p304 = por %p302, %p303
    %p305 = scmp.ne.s32.totalorder %s294, %s295
    %p306 = scmp.eq.s32.totalorder %s24, 0
    %p307 = por %p305, %p306
    %p308 = scmp.ne.s32.totalorder %s294, %s295
    %p309 = scmp.eq.s32.totalorder %s25, 1
    %p310 = por %p308, %p309
    %p312 = scmp.ne.s32.totalorder %s295, %s311
    %p313 = scmp.eq.s32.totalorder %s25, 0
    %p314 = por %p312, %p313
    %p315 = scmp.le.s32.totalorder 1, %s19
    %p316 = scmp.lt.s32.totalorder %s19, 3
    %p317 = pnand %p315, %p316
    %p318 = pneg %p317
    // Predicated region
    $region9: #{_forward_impl.1} parent=5 // pred_check
      _
    $region10: #{_forward_impl.1} parent=5 // pred_check_branch
      %320 = sbr.rel (%p317) target = $region12
    $region11: #{_forward_impl.1} parent=5 // pred_region
      %s321 = ssub.s32 %s19, 1
      // Predicated region
      $region13: #{_forward_impl.1} parent=11 // pred_check
        %p322 = pneg %p66
      $region14: #{_forward_impl.1} parent=11 // pred_check_branch
        %324 = sbr.rel (%p322) target = $region16
      $region15: #{_forward_impl.1} parent=11 // pred_region
        _
      $region16: #{_forward_impl.1} parent=11 // pred_fallthru
        _
      // Predicated region
      $region17: #{_forward_impl.1} parent=11 // pred_check
        %p325 = pneg %p87
      $region18: #{_forward_impl.1} parent=11 // pred_check_branch
        %327 = sbr.rel (%p325) target = $region20
      $region19: #{_forward_impl.1} parent=11 // pred_region
        _
      $region20: #{_forward_impl.1} parent=11 // pred_fallthru
        _
      // Predicated region
      $region21: #{_forward_impl.1} parent=11 // pred_check
        %p328 = pneg %p108
      $region22: #{_forward_impl.1} parent=11 // pred_check_branch
        %330 = sbr.rel (%p328) target = $region24
      $region23: #{_forward_impl.1} parent=11 // pred_region
        _
      $region24: #{_forward_impl.1} parent=11 // pred_fallthru
        _
      // Predicated region
      $region25: #{_forward_impl.1} parent=11 // pred_check
        %p331 = pneg %p129
      $region26: #{_forward_impl.1} parent=11 // pred_check_branch
        %333 = sbr.rel (%p331) target = $region28
      $region27: #{_forward_impl.1} parent=11 // pred_region
        _
      $region28: #{_forward_impl.1} parent=11 // pred_fallthru
        _
      // Predicated region
      $region29: #{_forward_impl.1} parent=11 // pred_check
        %p334 = pneg %p150
      $region30: #{_forward_impl.1} parent=11 // pred_check_branch
        %336 = sbr.rel (%p334) target = $region32
      $region31: #{_forward_impl.1} parent=11 // pred_region
        _
      $region32: #{_forward_impl.1} parent=11 // pred_fallthru
        _
      // Predicated region
      $region33: #{_forward_impl.1} parent=11 // pred_check
        %p337 = pneg %p171
      $region34: #{_forward_impl.1} parent=11 // pred_check_branch
        %339 = sbr.rel (%p337) target = $region36
      $region35: #{_forward_impl.1} parent=11 // pred_region
        _
      $region36: #{_forward_impl.1} parent=11 // pred_fallthru
        _
      // Predicated region
      $region37: #{_forward_impl.1} parent=11 // pred_check
        %p340 = pneg %p192
      $region38: #{_forward_impl.1} parent=11 // pred_check_branch
        %342 = sbr.rel (%p340) target = $region40
      $region39: #{_forward_impl.1} parent=11 // pred_region
        _
      $region40: #{_forward_impl.1} parent=11 // pred_fallthru
        _
      // Predicated region
      $region41: #{_forward_impl.1} parent=11 // pred_check
        %p343 = pneg %p213
      $region42: #{_forward_impl.1} parent=11 // pred_check_branch
        %345 = sbr.rel (%p343) target = $region44
      $region43: #{_forward_impl.1} parent=11 // pred_region
        _
      $region44: #{_forward_impl.1} parent=11 // pred_fallthru
        _
      // Predicated region
      $region45: #{_forward_impl.1} parent=11 // pred_check
        %p346 = pneg %p234
      $region46: #{_forward_impl.1} parent=11 // pred_check_branch
        %348 = sbr.rel (%p346) target = $region48
      $region47: #{_forward_impl.1} parent=11 // pred_region
        _
      $region48: #{_forward_impl.1} parent=11 // pred_fallthru
        _
      // Predicated region
      $region49: #{_forward_impl.1} parent=11 // pred_check
        %p349 = pneg %p255
      $region50: #{_forward_impl.1} parent=11 // pred_check_branch
        %351 = sbr.rel (%p349) target = $region52
      $region51: #{_forward_impl.1} parent=11 // pred_region
        _
      $region52: #{_forward_impl.1} parent=11 // pred_fallthru
        _
    $region12: #{_forward_impl.1} parent=5 // pred_fallthru
      _
    %p352 = scmp.lt.s32.totalorder %s19, 2
    // Predicated region
    $region53: #{_forward_impl.1} parent=5 // pred_check
      %p353 = pneg %p352
    $region54: #{_forward_impl.1} parent=5 // pred_check_branch
      %355 = sbr.rel (%p353) target = $region56
    $region55: #{_forward_impl.1} parent=5 // pred_region
      // Predicated region
      $region57: #{_forward_impl.1} parent=55 // pred_check
        %p356 = pneg %p39
      $region58: #{_forward_impl.1} parent=55 // pred_check_branch
        %358 = sbr.rel (%p356) target = $region60
      $region59: #{_forward_impl.1} parent=55 // pred_region
        %p359 = scmp.lt.s32.totalorder %s19, 1
        %s360 = scalar_select %p359, %s19, 1
        %s361 = smul.addr %s360, 2
        %s362 = smul.addr %s361, 8
        %s363 = scalar_lea.vmem %s0, %s362
      $region60: #{_forward_impl.1} parent=55 // pred_fallthru
        _
    $region56: #{_forward_impl.1} parent=5 // pred_fallthru
      _
    %p364 = scmp.le.s32.totalorder 1, %s19
    %p365 = scmp.lt.s32.totalorder %s19, 3
    %p366 = pnand %p364, %p365
    %p367 = pneg %p366
    // Predicated region
    $region61: #{_forward_impl.1} parent=5 // pred_check
      _
    $region62: #{_forward_impl.1} parent=5 // pred_check_branch
      %369 = sbr.rel (%p366) target = $region64
    $region63: #{_forward_impl.1} parent=5 // pred_region
      %s370 = ssub.s32 %s19, 1
      %p371 = scmp.lt.s32.totalorder %s24, 1
      %s372 = scalar_select %p371, %s24, 1
      %s373 = smul.addr %s372, 2
      %s374 = smul.addr %s373, 8
      %s375 = scalar_lea.vmem %s0, %s374
      %p376 = pneg %p45
      %p377 = pneg %p42
      %p378 = pneg %p66
      %p379 = pneg %p63
      %p380 = pneg %p87
      %p381 = pneg %p84
      %p382 = pneg %p108
      %p383 = pneg %p105
      %p384 = pneg %p129
      %p385 = pneg %p126
      %p386 = pneg %p150
      %p387 = pneg %p147
      %p388 = pneg %p171
      %p389 = pneg %p168
      %p390 = pneg %p192
      %p391 = pneg %p189
      %p392 = pneg %p213
      %p393 = pneg %p210
      %p394 = pneg %p234
      %p395 = pneg %p231
      %p396 = pneg %p255
      %p397 = pneg %p252
      %p398 = pneg %p281
      %p399 = pneg %p278
      %p400 = scmp.lt.s32.totalorder %s24, 1
      %s401 = scalar_select %p400, %s24, 1
      %s402 = smul.addr %s401, 2
      %s403 = smul.addr %s402, 8
      %s404 = scalar_lea.vmem %s11, %s403
      %p405 = pneg %p307
      %p406 = pneg %p304
      %p407 = scmp.lt.s32.totalorder %s24, 1
      %s408 = scalar_select %p407, %s24, 1
      %s409 = smul.addr %s408, 8
      %s410 = scalar_lea.vmem %s12, %s409
      %p411 = scmp.lt.s32.totalorder %s24, 1
      %s412 = scalar_select %p411, %s24, 1
      %s413 = smul.addr %s412, 2
      %s414 = smul.addr %s413, 8
      %s415 = scalar_lea.vmem %s0, %s414
      %p416 = scmp.lt.s32.totalorder %s24, 1
      %s417 = scalar_select %p416, %s24, 1
      %s418 = smul.addr %s417, 2
      %s419 = smul.addr %s418, 8
      %s420 = scalar_lea.vmem %s11, %s419
      %p421 = scmp.lt.s32.totalorder %s24, 1
      %s422 = scalar_select %p421, %s24, 1
      %s423 = smul.addr %s422, 8
      %s424 = scalar_lea.vmem %s12, %s423
      %v425 = vld [vmem:[%s415] sm:$0xff]
      %v426 = vld [vmem:[%s415 + $0x8] sm:$0xff]
      %428 = vrot.lane.b32.xlu0 %v426, 17
      %v429 = vpop.permute.xlu0 %428
      %432 = vrot.lane.b32.xlu0 %v425, 17
      %v433 = vpop.permute.xlu0 %432
      %vm434 = vcmask 138240
      %v435 = vsel %vm434, %v433, %v429
      %v438 = vsel %vm434, %v429, %v433
      %v439 = vld [vmem:[%s1] ss:$8 sm:$0x3]
      %v441 = vperm.slane %v439, 0
      %v442 = vperm.slane %v439, 1
      %v445 = vmul.f32 %v438, %v441
      %v446 = vmul.f32 %v435, %v442
      %447 = vrot.lane.b32.xlu0 %v426, 16
      %v448 = vpop.permute.xlu0 %447
      %450 = vrot.lane.b32.xlu0 %v425, 16
      %v451 = vpop.permute.xlu0 %450
      %vm452 = vcmask 130048
      %v453 = vsel %vm452, %v451, %v448
      %v456 = vsel %vm452, %v448, %v451
      %s457 = scalar_lea.vmem %s1, 1
      %v458 = vld [vmem:[%s457] ss:$8 sm:$0x3]
      %v460 = vperm.slane %v458, 0
      %v461 = vperm.slane %v458, 1
      %v464 = vmul.f32 %v456, %v460
      %v465 = vmul.f32 %v453, %v461
      %466 = vrot.lane.b32.xlu0 %v426, 15
      %v467 = vpop.permute.xlu0 %466
      %469 = vrot.lane.b32.xlu0 %v425, 15
      %v470 = vpop.permute.xlu0 %469
      %vm471 = vcmask 121856
      %v472 = vsel %vm471, %v470, %v467
      %v475 = vsel %vm471, %v467, %v470
      %s476 = scalar_lea.vmem %s1, 2
      %v477 = vld [vmem:[%s476] ss:$8 sm:$0x3]
      %v479 = vperm.slane %v477, 0
      %v480 = vperm.slane %v477, 1
      %v483 = vmul.f32 %v475, %v479
      %v484 = vmul.f32 %v472, %v480
      %485 = vrot.lane.b32.xlu0 %v426, 1
      %v486 = vpop.permute.xlu0 %485
      %488 = vrot.lane.b32.xlu0 %v425, 1
      %v489 = vpop.permute.xlu0 %488
      %vm490 = vcmask 7168
      %v491 = vsel %vm490, %v489, %v486
      %v494 = vsel %vm490, %v486, %v489
      %s495 = scalar_lea.vmem %s1, 3
      %v496 = vld [vmem:[%s495] ss:$8 sm:$0x3]
      %v498 = vperm.slane %v496, 0
      %v499 = vperm.slane %v496, 1
      %v502 = vmul.f32 %v494, %v498
      %v503 = vmul.f32 %v491, %v499
      %504 = vrot.lane.b32.xlu0 %v425, 127
      %v505 = vpop.permute.xlu0 %504
      %506 = vrot.lane.b32.xlu0 %v426, 127
      %v507 = vpop.permute.xlu0 %506
      %vm508 = vcmask 1039360
      %v509 = vsel %vm508, %v505, %v507
      %v513 = vsel %vm508, %v507, %v505
      %s514 = scalar_lea.vmem %s1, 5
      %v515 = vld [vmem:[%s514] ss:$8 sm:$0x3]
      %v517 = vperm.slane %v515, 0
      %v518 = vperm.slane %v515, 1
      %v521 = vmul.f32 %v509, %v517
      %v522 = vmul.f32 %v513, %v518
      %523 = vrot.lane.b32.xlu0 %v425, 113
      %v524 = vpop.permute.xlu0 %523
      %525 = vrot.lane.b32.xlu0 %v426, 113
      %v526 = vpop.permute.xlu0 %525
      %vm527 = vcmask 924672
      %v528 = vsel %vm527, %v524, %v526
      %v532 = vsel %vm527, %v526, %v524
      %s533 = scalar_lea.vmem %s1, 6
      %v534 = vld [vmem:[%s533] ss:$8 sm:$0x3]
      %v536 = vperm.slane %v534, 0
      %v537 = vperm.slane %v534, 1
      %v540 = vmul.f32 %v528, %v536
      %v541 = vmul.f32 %v532, %v537
      %542 = vrot.lane.b32.xlu0 %v425, 112
      %v543 = vpop.permute.xlu0 %542
      %544 = vrot.lane.b32.xlu0 %v426, 112
      %v545 = vpop.permute.xlu0 %544
      %vm546 = vcmask 916480
      %v547 = vsel %vm546, %v543, %v545
      %v551 = vsel %vm546, %v545, %v543
      %s552 = scalar_lea.vmem %s1, 7
      %v553 = vld [vmem:[%s552] ss:$8 sm:$0x3]
      %v555 = vperm.slane %v553, 0
      %v556 = vperm.slane %v553, 1
      %v559 = vmul.f32 %v547, %v555
      %v560 = vmul.f32 %v551, %v556
      %561 = vrot.lane.b32.xlu0 %v425, 111
      %v562 = vpop.permute.xlu0 %561
      %563 = vrot.lane.b32.xlu0 %v426, 111
      %v564 = vpop.permute.xlu0 %563
      %vm565 = vcmask 908288
      %v566 = vsel %vm565, %v562, %v564
      %v570 = vsel %vm565, %v564, %v562
      %s571 = scalar_lea.vmem %s1, 16
      %v572 = vld [vmem:[%s571] ss:$8 sm:$0x3]
      %v574 = vperm.slane %v572, 0
      %v575 = vperm.slane %v572, 1
      %v578 = vmul.f32 %v566, %v574
      %v579 = vmul.f32 %v570, %v575
      %v580 = vld [vmem:[%s5] sm:$0xff]
      %vm581 = vcmask 588800
      %v583 = vsel %vm581, %v580, 0
      %585 = vmatpush.msra.mxu0 0.0
      %586 = vmatpush.msra.mxu0 0.0
      %587 = vmatpush.msra.mxu0 0.0
      %588 = vmatpush.msra.mxu0 0.0
      %589 = vmatpush.msra.mxu0 0.0
      %590 = vmatpush.msra.mxu0 0.0
      %591 = vmatpush.msra.mxu0 0.0
      %592 = vmatpush.msra.mxu0 %v578
      %593 = vmatpush.msra.mxu0 %v559
      %594 = vmatpush.msra.mxu0 %v540
      %595 = vmatpush.msra.mxu0 %v521
      %596 = vmatpush.msra.mxu0 %v425
      %597 = vmatpush.msra.mxu0 %v502
      %598 = vmatpush.msra.mxu0 %v483
      %599 = vmatpush.msra.mxu0 %v464
      %600 = vmatpush.msra.mxu0 %v445
      %601 = vmatmul.f32.gmra.mxu0 %v583
      %v602 = vpop.f32.mrf.mxu0
      %v603 = vadd.f32 0.0, %v602
      %604 = vdwg.mxu0
      %605 = vmatpush.msra.mxu0 0.0
      %606 = vmatpush.msra.mxu0 0.0
      %607 = vmatpush.msra.mxu0 0.0
      %608 = vmatpush.msra.mxu0 0.0
      %609 = vmatpush.msra.mxu0 0.0
      %610 = vmatpush.msra.mxu0 0.0
      %611 = vmatpush.msra.mxu0 0.0
      %612 = vmatpush.msra.mxu0 %v579
      %613 = vmatpush.msra.mxu0 %v560
      %614 = vmatpush.msra.mxu0 %v541
      %615 = vmatpush.msra.mxu0 %v522
      %616 = vmatpush.msra.mxu0 %v426
      %617 = vmatpush.msra.mxu0 %v503
      %618 = vmatpush.msra.mxu0 %v484
      %619 = vmatpush.msra.mxu0 %v465
      %620 = vmatpush.msra.mxu0 %v446
      %621 = vmatmul.f32.gmra.mxu0 %v583
      %v622 = vpop.f32.mrf.mxu0
      %v623 = vadd.f32 0.0, %v622
      %624 = vdwg.mxu0
      %v625 = vadd.f32 %v603, %v623
      %626 = vadd.xlane.f32.xlu0 %v625
      %v627 = vpop.xlane.xlu0 %626
      %v628 = vmul.f32 %v603, %v603
      %v629 = vmul.f32 %v623, %v623
      %v630 = vadd.f32 %v628, %v629
      %631 = vadd.xlane.f32.xlu0 %v630
      %v632 = vpop.xlane.xlu0 %631
      %v633 = vmul.f32 %v627, 0.00390625
      %v634 = vmul.f32 %v632, 0.00390625
      %v635 = vmul.f32 %v633, %v633
      %v636 = vsub.f32 %v634, %v635
      %v637 = vadd.f32 %v636, 1e-05
      %v638 = vrsqrt.pop %v637
      %v639 = vmul.f32 %v638, %v637
      %v640 = vmul.f32 %v639, %v638
      %v641 = vmul.f32 0.5, %v640
      %v642 = vsub.f32 1.5, %v641
      %v643 = vmul.f32 %v638, %v642
      %vm644 = vweird.f32 %v637
      %vm645 = vweird.f32 %v638
      %vm646 = vmor %vm644, %vm645
      %v647 = vsel %vm646, %v638, %v643
      %v648 = vld [vmem:[%s6] sm:$0xff]
      %v649 = vmul.f32 %v647, %v648
      %v650 = vld [vmem:[%s7] sm:$0xff]
      %v651 = vmul.f32 %v633, %v649
      %v652 = vsub.f32 %v650, %v651
      %654 = vset.pattern.permute.xlu0 0
      %655 = vperm.xlu0 %654, %v649
      %v656 = vpop.permute.xlu0 %655
      %v658 = vmul.f32 %v603, %v656
      %v659 = vmul.f32 %v623, %v656
      %661 = vset.pattern.permute.xlu0 0
      %662 = vperm.xlu0 %661, %v652
      %v663 = vpop.permute.xlu0 %662
      %v665 = vadd.f32 %v658, %v663
      %v666 = vadd.f32 %v659, %v663
      %v667 = vmul.f32 %v665, 0.01
      %v668 = vmul.f32 %v666, 0.01
      %v669 = vmax.f32 %v665, %v667
      %v670 = vmax.f32 %v666, %v668
      %672 = vrot.lane.b32.xlu0 %v670, 17
      %v673 = vpop.permute.xlu0 %672
      %676 = vrot.lane.b32.xlu0 %v669, 17
      %v677 = vpop.permute.xlu0 %676
      %v678 = vsel %vm434, %v677, %v673
      %v681 = vsel %vm434, %v673, %v677
      %v682 = vmul.f32 %v681, %v441
      %v683 = vmul.f32 %v678, %v442
      %684 = vrot.lane.b32.xlu0 %v670, 16
      %v685 = vpop.permute.xlu0 %684
      %687 = vrot.lane.b32.xlu0 %v669, 16
      %v688 = vpop.permute.xlu0 %687
      %v689 = vsel %vm452, %v688, %v685
      %v692 = vsel %vm452, %v685, %v688
      %v693 = vmul.f32 %v692, %v460
      %v694 = vmul.f32 %v689, %v461
      %695 = vrot.lane.b32.xlu0 %v670, 15
      %v696 = vpop.permute.xlu0 %695
      %698 = vrot.lane.b32.xlu0 %v669, 15
      %v699 = vpop.permute.xlu0 %698
      %v700 = vsel %vm471, %v699, %v696
      %v703 = vsel %vm471, %v696, %v699
      %v704 = vmul.f32 %v703, %v479
      %v705 = vmul.f32 %v700, %v480
      %706 = vrot.lane.b32.xlu0 %v670, 1
      %v707 = vpop.permute.xlu0 %706
      %709 = vrot.lane.b32.xlu0 %v669, 1
      %v710 = vpop.permute.xlu0 %709
      %v711 = vsel %vm490, %v710, %v707
      %v714 = vsel %vm490, %v707, %v710
      %v715 = vmul.f32 %v714, %v498
      %v716 = vmul.f32 %v711, %v499
      %717 = vrot.lane.b32.xlu0 %v669, 127
      %v718 = vpop.permute.xlu0 %717
      %719 = vrot.lane.b32.xlu0 %v670, 127
      %v720 = vpop.permute.xlu0 %719
      %v721 = vsel %vm508, %v718, %v720
      %v725 = vsel %vm508, %v720, %v718
      %v726 = vmul.f32 %v721, %v517
      %v727 = vmul.f32 %v725, %v518
      %728 = vrot.lane.b32.xlu0 %v669, 113
      %v729 = vpop.permute.xlu0 %728
      %730 = vrot.lane.b32.xlu0 %v670, 113
      %v731 = vpop.permute.xlu0 %730
      %v732 = vsel %vm527, %v729, %v731
      %v736 = vsel %vm527, %v731, %v729
      %v737 = vmul.f32 %v732, %v536
      %v738 = vmul.f32 %v736, %v537
      %739 = vrot.lane.b32.xlu0 %v669, 112
      %v740 = vpop.permute.xlu0 %739
      %741 = vrot.lane.b32.xlu0 %v670, 112
      %v742 = vpop.permute.xlu0 %741
      %v743 = vsel %vm546, %v740, %v742
      %v747 = vsel %vm546, %v742, %v740
      %v748 = vmul.f32 %v743, %v555
      %v749 = vmul.f32 %v747, %v556
      %750 = vrot.lane.b32.xlu0 %v669, 111
      %v751 = vpop.permute.xlu0 %750
      %752 = vrot.lane.b32.xlu0 %v670, 111
      %v753 = vpop.permute.xlu0 %752
      %v754 = vsel %vm565, %v751, %v753
      %v758 = vsel %vm565, %v753, %v751
      %v759 = vmul.f32 %v754, %v574
      %v760 = vmul.f32 %v758, %v575
      %v761 = vld [vmem:[%s8] sm:$0xff]
      %v763 = vsel %vm581, %v761, 0
      %765 = vmatpush.msra.mxu0 0.0
      %766 = vmatpush.msra.mxu0 0.0
      %767 = vmatpush.msra.mxu0 0.0
      %768 = vmatpush.msra.mxu0 0.0
      %769 = vmatpush.msra.mxu0 0.0
      %770 = vmatpush.msra.mxu0 0.0
      %771 = vmatpush.msra.mxu0 0.0
      %772 = vmatpush.msra.mxu0 %v759
      %773 = vmatpush.msra.mxu0 %v748
      %774 = vmatpush.msra.mxu0 %v737
      %775 = vmatpush.msra.mxu0 %v726
      %776 = vmatpush.msra.mxu0 %v669
      %777 = vmatpush.msra.mxu0 %v715
      %778 = vmatpush.msra.mxu0 %v704
      %779 = vmatpush.msra.mxu0 %v693
      %780 = vmatpush.msra.mxu0 %v682
      %781 = vmatmul.f32.gmra.mxu0 %v763
      %v782 = vpop.f32.mrf.mxu0
      %v783 = vadd.f32 0.0, %v782
      %784 = vdwg.mxu0
      %785 = vmatpush.msra.mxu0 0.0
      %786 = vmatpush.msra.mxu0 0.0
      %787 = vmatpush.msra.mxu0 0.0
      %788 = vmatpush.msra.mxu0 0.0
      %789 = vmatpush.msra.mxu0 0.0
      %790 = vmatpush.msra.mxu0 0.0
      %791 = vmatpush.msra.mxu0 0.0
      %792 = vmatpush.msra.mxu0 %v760
      %793 = vmatpush.msra.mxu0 %v749
      %794 = vmatpush.msra.mxu0 %v738
      %795 = vmatpush.msra.mxu0 %v727
      %796 = vmatpush.msra.mxu0 %v670
      %797 = vmatpush.msra.mxu0 %v716
      %798 = vmatpush.msra.mxu0 %v705
      %799 = vmatpush.msra.mxu0 %v694
      %800 = vmatpush.msra.mxu0 %v683
      %801 = vmatmul.f32.gmra.mxu0 %v763
      %v802 = vpop.f32.mrf.mxu0
      %v803 = vadd.f32 0.0, %v802
      %804 = vdwg.mxu0
      %v805 = vadd.f32 %v783, %v803
      %806 = vadd.xlane.f32.xlu0 %v805
      %v807 = vpop.xlane.xlu0 %806
      %v808 = vmul.f32 %v783, %v783
      %v809 = vmul.f32 %v803, %v803
      %v810 = vadd.f32 %v808, %v809
      %811 = vadd.xlane.f32.xlu0 %v810
      %v812 = vpop.xlane.xlu0 %811
      %v813 = vmul.f32 %v807, 0.00390625
      %v814 = vmul.f32 %v812, 0.00390625
      %v815 = vmul.f32 %v813, %v813
      %v816 = vsub.f32 %v814, %v815
      %v817 = vadd.f32 %v816, 1e-05
      %v818 = vrsqrt.pop %v817
      %v819 = vmul.f32 %v818, %v817
      %v820 = vmul.f32 %v819, %v818
      %v821 = vmul.f32 0.5, %v820
      %v822 = vsub.f32 1.5, %v821
      %v823 = vmul.f32 %v818, %v822
      %vm824 = vweird.f32 %v817
      %vm825 = vweird.f32 %v818
      %vm826 = vmor %vm824, %vm825
      %v827 = vsel %vm826, %v818, %v823
      %v828 = vld [vmem:[%s9] sm:$0xff]
      %v829 = vmul.f32 %v827, %v828
      %v830 = vld [vmem:[%s10] sm:$0xff]
      %v831 = vmul.f32 %v813, %v829
      %v832 = vsub.f32 %v830, %v831
      %834 = vset.pattern.permute.xlu0 0
      %835 = vperm.xlu0 %834, %v829
      %v836 = vpop.permute.xlu0 %835
      %v838 = vmul.f32 %v783, %v836
      %v839 = vmul.f32 %v803, %v836
      %841 = vset.pattern.permute.xlu0 0
      %842 = vperm.xlu0 %841, %v832
      %v843 = vpop.permute.xlu0 %842
      %v845 = vadd.f32 %v838, %v843
      %v846 = vadd.f32 %v839, %v843
      %v847 = vmul.f32 %v845, 0.01
      %v848 = vmul.f32 %v846, 0.01
      %v849 = vmax.f32 %v845, %v847
      %v850 = vmax.f32 %v846, %v848
      %851 = vst [vmem:[%s420] sm:$0xff] %v849
      %852 = vst [vmem:[%s420 + $0x8] sm:$0xff] %v850
      %855 = vrot.lane.b32.xlu0 %v849, 127
      %v856 = vpop.permute.xlu0 %855
      %857 = vrot.lane.b32.xlu0 %v850, 127
      %v858 = vpop.permute.xlu0 %857
      %v859 = vsel %vm508, %v856, %v858
      %v863 = vsel %vm508, %v858, %v856
      %v864 = vmax.f32 %v849, %v859
      %v865 = vmax.f32 %v850, %v863
      %868 = vrot.lane.b32.xlu0 %v864, 112
      %v869 = vpop.permute.xlu0 %868
      %870 = vrot.lane.b32.xlu0 %v865, 112
      %v871 = vpop.permute.xlu0 %870
      %v872 = vsel %vm546, %v869, %v871
      %v876 = vsel %vm546, %v871, %v869
      %v877 = vmax.f32 %v864, %v872
      %v878 = vmax.f32 %v865, %v876
      %v879 = vld [vmem:[%s4] sm:$0xff]
      %v880 = vld [vmem:[%s4 + $0x8] sm:$0xff]
      %v881 = vld [vmem:[%s4 + $0x10] sm:$0xff]
      %v882 = vld [vmem:[%s4 + $0x18] sm:$0xff]
      %v883 = vld [vmem:[%s4 + $0x20] sm:$0xff]
      %v884 = vld [vmem:[%s4 + $0x28] sm:$0xff]
      %v885 = vld [vmem:[%s4 + $0x30] sm:$0xff]
      %v886 = vld [vmem:[%s4 + $0x38] sm:$0xff]
      %v887 = vld [vmem:[%s4 + $0x40] sm:$0xff]
      %v888 = vld [vmem:[%s4 + $0x48] sm:$0xff]
      %v889 = vld [vmem:[%s4 + $0x50] sm:$0xff]
      %v890 = vld [vmem:[%s4 + $0x58] sm:$0xff]
      %v891 = vld [vmem:[%s4 + $0x60] sm:$0xff]
      %v892 = vld [vmem:[%s4 + $0x68] sm:$0xff]
      %v893 = vld [vmem:[%s4 + $0x70] sm:$0xff]
      %v894 = vld [vmem:[%s4 + $0x78] sm:$0xff]
      %v895 = vld [vmem:[%s4 + $0x80] sm:$0xff]
      %v896 = vld [vmem:[%s4 + $0x88] sm:$0xff]
      %v897 = vld [vmem:[%s4 + $0x90] sm:$0xff]
      %v898 = vld [vmem:[%s4 + $0x98] sm:$0xff]
      %v899 = vld [vmem:[%s4 + $0xa0] sm:$0xff]
      %v900 = vld [vmem:[%s4 + $0xa8] sm:$0xff]
      %v901 = vld [vmem:[%s4 + $0xb0] sm:$0xff]
      %v902 = vld [vmem:[%s4 + $0xb8] sm:$0xff]
      %v903 = vld [vmem:[%s4 + $0xc0] sm:$0xff]
      %v904 = vld [vmem:[%s4 + $0xc8] sm:$0xff]
      %v905 = vld [vmem:[%s4 + $0xd0] sm:$0xff]
      %v906 = vld [vmem:[%s4 + $0xd8] sm:$0xff]
      %v907 = vld [vmem:[%s4 + $0xe0] sm:$0xff]
      %v908 = vld [vmem:[%s4 + $0xe8] sm:$0xff]
      %v909 = vld [vmem:[%s4 + $0xf0] sm:$0xff]
      %v910 = vld [vmem:[%s4 + $0xf8] sm:$0xff]
      %911 = vmatpush.msra.mxu0 %v894
      %912 = vmatpush.msra.mxu0 %v893
      %913 = vmatpush.msra.mxu0 %v892
      %914 = vmatpush.msra.mxu0 %v891
      %915 = vmatpush.msra.mxu0 %v890
      %916 = vmatpush.msra.mxu0 %v889
      %917 = vmatpush.msra.mxu0 %v888
      %918 = vmatpush.msra.mxu0 %v887
      %919 = vmatpush.msra.mxu0 %v886
      %920 = vmatpush.msra.mxu0 %v885
      %921 = vmatpush.msra.mxu0 %v884
      %922 = vmatpush.msra.mxu0 %v883
      %923 = vmatpush.msra.mxu0 %v882
      %924 = vmatpush.msra.mxu0 %v881
      %925 = vmatpush.msra.mxu0 %v880
      %926 = vmatpush.msra.mxu0 %v879
      %927 = vmatmul.f32.gmra.mxu0 %v877
      %v928 = vpop.f32.mrf.mxu0
      %v929 = vadd.f32 0.0, %v928
      %930 = vdwg.mxu0
      %931 = vmatpush.msra.mxu0 %v910
      %932 = vmatpush.msra.mxu0 %v909
      %933 = vmatpush.msra.mxu0 %v908
      %934 = vmatpush.msra.mxu0 %v907
      %935 = vmatpush.msra.mxu0 %v906
      %936 = vmatpush.msra.mxu0 %v905
      %937 = vmatpush.msra.mxu0 %v904
      %938 = vmatpush.msra.mxu0 %v903
      %939 = vmatpush.msra.mxu0 %v902
      %940 = vmatpush.msra.mxu0 %v901
      %941 = vmatpush.msra.mxu0 %v900
      %942 = vmatpush.msra.mxu0 %v899
      %943 = vmatpush.msra.mxu0 %v898
      %944 = vmatpush.msra.mxu0 %v897
      %945 = vmatpush.msra.mxu0 %v896
      %946 = vmatpush.msra.mxu0 %v895
      %947 = vmatmul.f32.gmra.mxu0 %v878
      %v948 = vpop.f32.mrf.mxu0
      %v949 = vadd.f32 %v929, %v948
      %950 = vdwg.mxu0
      %vm951 = vcmask 523264
      %952 = vst.msk [vmem:[%s424] sm:$0xff] %vm951, %v949
      %p953 = scmp.lt.s32.totalorder %s24, 1
      %s954 = scalar_select %p953, %s24, 1
      %s955 = smul.addr %s954, 2
      %s956 = smul.addr %s955, 8
      %s957 = scalar_lea.vmem %s11, %s956
      %p958 = scmp.lt.s32.totalorder %s24, 1
      %s959 = scalar_select %p958, %s24, 1
      %s960 = smul.addr %s959, 8
      %s961 = scalar_lea.vmem %s12, %s960
      // Predicated region
      $region65: #{_forward_impl.1} parent=63 // pred_check
        %p962 = pneg %p278
      $region66: #{_forward_impl.1} parent=63 // pred_check_branch
        %964 = sbr.rel (%p962) target = $region68
      $region67: #{_forward_impl.1} parent=63 // pred_region
        _
      $region68: #{_forward_impl.1} parent=63 // pred_fallthru
        _
      // Predicated region
      $region69: #{_forward_impl.1} parent=63 // pred_check
        %p965 = pneg %p304
      $region70: #{_forward_impl.1} parent=63 // pred_check_branch
        %967 = sbr.rel (%p965) target = $region72
      $region71: #{_forward_impl.1} parent=63 // pred_region
        _
      $region72: #{_forward_impl.1} parent=63 // pred_fallthru
        _
    $region64: #{_forward_impl.1} parent=5 // pred_fallthru
      _
    %p968 = scmp.le.s32.totalorder 2, %s19
    // Predicated region
    $region73: #{_forward_impl.1} parent=5 // pred_check
      %p969 = pneg %p968
    $region74: #{_forward_impl.1} parent=5 // pred_check_branch
      %971 = sbr.rel (%p969) target = $region76
    $region75: #{_forward_impl.1} parent=5 // pred_region
      %s972 = ssub.s32 %s19, 2
      // Predicated region
      $region77: #{_forward_impl.1} parent=75 // pred_check
        %p973 = pneg %p284
      $region78: #{_forward_impl.1} parent=75 // pred_check_branch
        %975 = sbr.rel (%p973) target = $region80
      $region79: #{_forward_impl.1} parent=75 // pred_region
        %p976 = scmp.lt.s32.totalorder %s25, 1
        %s977 = scalar_select %p976, %s25, 1
        %s978 = smul.addr %s977, 2
        %s979 = smul.addr %s978, 8
        %s980 = scalar_lea.vmem %s11, %s979
      $region80: #{_forward_impl.1} parent=75 // pred_fallthru
        _
      // Predicated region
      $region81: #{_forward_impl.1} parent=75 // pred_check
        %p981 = pneg %p310
      $region82: #{_forward_impl.1} parent=75 // pred_check_branch
        %983 = sbr.rel (%p981) target = $region84
      $region83: #{_forward_impl.1} parent=75 // pred_region
        %p984 = scmp.lt.s32.totalorder %s25, 1
        %s985 = scalar_select %p984, %s25, 1
        %s986 = smul.addr %s985, 8
        %s987 = scalar_lea.vmem %s12, %s986
      $region84: #{_forward_impl.1} parent=75 // pred_fallthru
        _
    $region76: #{_forward_impl.1} parent=5 // pred_fallthru
      _
  $region6: #{_forward_impl.1} parent=0 // loop_footer
    %s23 = sadd.s32 1, %s19
  $region7: #{_forward_impl.1} parent=0 // loop_footer_branch
    %18 = sbr.rel target = $region3
  $region8: #{_forward_impl.1} parent=0 // loop_exit
    _

</llo_original>
